<compile_context>
chip_gen: v5e
topology: v5e:2x2
jax: 0.10.0
libtpu: 0.0.40
codegen_flags: <defaults>
</compile_context>

<pallas_src>
import math
import jax
import jax.numpy as jnp
from jax.experimental import pallas as pl
from jax.experimental.pallas import tpu as pltpu


def igc_kernel(wav_ref,                       # SMEM (1, 3) view-mixing weights
               xs_row_ref,                    # (tm, F) row tile of X_s (residual e_s)
               adjs_ref, xsk_ref,             # (tm, tk), (tk, F)  self view
               adj2_ref, x2k_ref,             # (tm, tk), (tk, F)  view 2
               adj3_ref, x3k_ref,             # (tm, tk), (tk, F)  view 3
               ws_ref, w2_ref, w3_ref,        # (F, O_pad) per-view weights
               bias_ref,                      # (1, O_pad)
               out_ref,                       # (tm, O_pad)
               accs_ref, acc2_ref, acc3_ref): # (tm, F) f32 accumulators
    k = pl.program_id(1)

    @pl.when(k == 0)
    def _init():
        accs_ref[...] = jnp.zeros_like(accs_ref)
        acc2_ref[...] = jnp.zeros_like(acc2_ref)
        acc3_ref[...] = jnp.zeros_like(acc3_ref)

    # Reassociated neighborhood aggregation: accumulate (A @ X) over K tiles.
    # (tm, tk) @ (tk, F) -> (tm, F)   [MXU]
    accs_ref[...] += jnp.dot(adjs_ref[...], xsk_ref[...],
                             preferred_element_type=jnp.float32)
    acc2_ref[...] += jnp.dot(adj2_ref[...], x2k_ref[...],
                             preferred_element_type=jnp.float32)
    acc3_ref[...] += jnp.dot(adj3_ref[...], x3k_ref[...],
                             preferred_element_type=jnp.float32)

    @pl.when(k == pl.num_programs(1) - 1)
    def _finalize():
        # Fold 1.01 and the view-mixing weights into scalars applied to the tiny
        # (tm, F) accumulators (F << O), not to (tm, O_pad) tiles.
        s0 = 1.01 * wav_ref[0, 0]
        s1 = 1.01 * wav_ref[0, 1]
        s2 = 1.01 * wav_ref[0, 2]

        # Residual embedding for this row tile: (tm, F) @ (F, O_pad).
        e_s = jnp.dot(xs_row_ref[...], ws_ref[...],
                      preferred_element_type=jnp.float32)
        # Weighted neighborhood terms: ((A@X) scaled) @ W, all K = F = 8 matmuls.
        n_s = jnp.dot(s0 * accs_ref[...], ws_ref[...],
                      preferred_element_type=jnp.float32)
        n_2 = jnp.dot(s1 * acc2_ref[...], w2_ref[...],
                      preferred_element_type=jnp.float32)
        n_3 = jnp.dot(s2 * acc3_ref[...], w3_ref[...],
                      preferred_element_type=jnp.float32)

        out_ref[...] = e_s + n_s + n_2 + n_3 + bias_ref[...]


def _round_up(x, m):
    return ((x + m - 1) // m) * m


def interactive_graph_convolution(self_input, self_adj,
                                  view2_input, view2_adj,
                                  view3_input, view3_adj,
                                  weight_self, weight_view2, weight_view3,
                                  weight_all_views, bias,
                                  *, tm=256, tk=512):
    f32 = jnp.float32
    N, F = self_input.shape
    O = weight_self.shape[1]

    # Lane-dense output width (multiple of 128).
    O_pad = _round_up(O, 128)

    # Row-tile (sublane axis of A / rows of the output).
    tm = min(tm, _round_up(N, 8))
    Nr = _round_up(N, tm)
    # K-tile (lane axis of A / rows of the contracted X).
    tk = min(tk, _round_up(N, 128))
    Nk = _round_up(N, tk)

    def pad2(a, rows, cols):
        a = a.astype(f32)
        return jnp.pad(a, ((0, rows - a.shape[0]), (0, cols - a.shape[1])))

    # Zero padding is exact: padded A rows/cols and padded X rows contribute 0,
    # padded weight/bias columns produce 0 outputs that are sliced away.
    adjs = pad2(self_adj, Nr, Nk)
    adj2 = pad2(view2_adj, Nr, Nk)
    adj3 = pad2(view3_adj, Nr, Nk)
    xs_row = pad2(self_input, Nr, F)
    xs_k = pad2(self_input, Nk, F)
    x2_k = pad2(view2_input, Nk, F)
    x3_k = pad2(view3_input, Nk, F)
    ws_p = pad2(weight_self, F, O_pad)
    w2_p = pad2(weight_view2, F, O_pad)
    w3_p = pad2(weight_view3, F, O_pad)
    bias2d = pad2(bias.reshape(1, O), 1, O_pad)

    grid = (Nr // tm, Nk // tk)

    wav_spec = pl.BlockSpec(memory_space=pltpu.MemorySpace.SMEM)     # (1, 3) whole, SMEM
    a_spec = pl.BlockSpec((tm, tk), lambda i, k: (i, k))
    xk_spec = pl.BlockSpec((tk, F), lambda i, k: (k, 0))
    xrow_spec = pl.BlockSpec((tm, F), lambda i, k: (i, 0))
    w_spec = pl.BlockSpec((F, O_pad), lambda i, k: (0, 0))
    b_spec = pl.BlockSpec((1, O_pad), lambda i, k: (0, 0))
    out_spec = pl.BlockSpec((tm, O_pad), lambda i, k: (i, 0))

    out_pad = pl.pallas_call(
        igc_kernel,
        out_shape=jax.ShapeDtypeStruct((Nr, O_pad), f32),
        grid=grid,
        in_specs=[
            wav_spec,
            xrow_spec,
            a_spec, xk_spec,        # self view
            a_spec, xk_spec,        # view 2
            a_spec, xk_spec,        # view 3
            w_spec, w_spec, w_spec, # per-view weights (resident)
            b_spec,                 # bias (resident)
        ],
        out_specs=out_spec,
        scratch_shapes=[pltpu.VMEM((tm, F), f32)] * 3,
        compiler_params=pltpu.CompilerParams(
            dimension_semantics=("parallel", "arbitrary"),
            vmem_limit_bytes=32 * 1024 * 1024,
        ),
    )(weight_all_views.astype(f32), xs_row,
      adjs, xs_k, adj2, x2_k, adj3, x3_k,
      ws_p, w2_p, w3_p, bias2d)

    return out_pad[:N, :O]


def reference(self_input, self_adj, view2_input, view2_adj, view3_input, view3_adj,
              weight_self, weight_view2, weight_view3, weight_all_views, bias):
    e_s = self_input @ weight_self
    e_2 = view2_input @ weight_view2
    e_3 = view3_input @ weight_view3
    n_s = self_adj @ e_s
    n_2 = view2_adj @ e_2
    n_3 = view3_adj @ e_3
    nbr = jnp.stack([n_s, n_2, n_3], axis=1)                    # (N, 3, O)
    agg = jnp.squeeze(jnp.matmul(weight_all_views, nbr))        # (N, O)
    return e_s + 1.01 * agg + bias


if __name__ == "__main__":
    # Small shapes consistent with the module: N nodes, in_features -> out_features.
    # N = 300 (not a tile multiple) exercises padding; small demo tiles give a 3x3 grid.
    N, IN_F, OUT_F = 300, 8, 32

    key = jax.random.PRNGKey(0)
    keys = jax.random.split(key, 11)

    # Deterministic parameter init mirroring reset_parameters (uniform(-stdv, stdv)).
    stdv_w = 1.0 / math.sqrt(OUT_F)
    stdv_v = 1.0 / math.sqrt(3.0)
    weight_self = jax.random.uniform(keys[0], (IN_F, OUT_F), jnp.float32, -stdv_w, stdv_w)
    weight_view2 = jax.random.uniform(keys[1], (IN_F, OUT_F), jnp.float32, -stdv_w, stdv_w)
    weight_view3 = jax.random.uniform(keys[2], (IN_F, OUT_F), jnp.float32, -stdv_w, stdv_w)
    weight_all_views = jax.random.uniform(keys[3], (1, 3), jnp.float32, -stdv_v, stdv_v)
    bias = jax.random.uniform(keys[4], (OUT_F,), jnp.float32, -stdv_v, stdv_v)

    # Inputs: node features per view and dense (row-normalized) adjacencies per view.
    self_input = jax.random.normal(keys[5], (N, IN_F), jnp.float32)
    view2_input = jax.random.normal(keys[6], (N, IN_F), jnp.float32)
    view3_input = jax.random.normal(keys[7], (N, IN_F), jnp.float32)

    def make_adj(k):
        a = (jax.random.uniform(k, (N, N)) > 0.7).astype(jnp.float32)
        a = a + jnp.eye(N, dtype=jnp.float32)
        return a / jnp.sum(a, axis=1, keepdims=True)

    self_adj = make_adj(keys[8])
    view2_adj = make_adj(keys[9])
    view3_adj = make_adj(keys[10])

    out = interactive_graph_convolution(
        self_input, self_adj, view2_input, view2_adj, view3_input, view3_adj,
        weight_self, weight_view2, weight_view3, weight_all_views, bias,
        tm=128, tk=128)   # small tiles so the demo exercises the full 3x3 pipelined grid
    out = jax.block_until_ready(out)

    ref = reference(
        self_input, self_adj, view2_input, view2_adj, view3_input, view3_adj,
        weight_self, weight_view2, weight_view3, weight_all_views, bias)

    assert out.shape == (N, OUT_F)
    # Reassociation (A@X)@W vs A@(X@W) gives ~1e-6-level fp differences.
    assert jnp.allclose(out, ref, atol=1e-4, rtol=1e-4), float(jnp.max(jnp.abs(out - ref)))
    print("KERNEL_OK")
</pallas_src>

<mosaic_0001>
module attributes {stable_mosaic.version = 11 : i64} {
  func.func @igc_kernel(%arg0: i32, %arg1: i32, %arg2: memref<1x3xf32, #tpu.memory_space<smem>>, %arg3: memref<128x8xf32, #tpu.memory_space<vmem>>, %arg4: memref<128x128xf32, #tpu.memory_space<vmem>>, %arg5: memref<128x8xf32, #tpu.memory_space<vmem>>, %arg6: memref<128x128xf32, #tpu.memory_space<vmem>>, %arg7: memref<128x8xf32, #tpu.memory_space<vmem>>, %arg8: memref<128x128xf32, #tpu.memory_space<vmem>>, %arg9: memref<128x8xf32, #tpu.memory_space<vmem>>, %arg10: memref<8x128xf32, #tpu.memory_space<vmem>>, %arg11: memref<8x128xf32, #tpu.memory_space<vmem>>, %arg12: memref<8x128xf32, #tpu.memory_space<vmem>>, %arg13: memref<1x128xf32, #tpu.memory_space<vmem>>, %arg14: memref<128x128xf32, #tpu.memory_space<vmem>>, %arg15: memref<128x8xf32, #tpu.memory_space<vmem>>, %arg16: memref<128x8xf32, #tpu.memory_space<vmem>>, %arg17: memref<128x8xf32, #tpu.memory_space<vmem>>) attributes {dimension_semantics = [#tpu.dimension_semantics<parallel>, #tpu.dimension_semantics<arbitrary>], iteration_bounds = array<i64: 3, 3>, scalar_prefetch = 0 : i64, scratch_operands = 3 : i64, tpu.core_type = #tpu.core_type<tc>, window_params = [{transform_indices = @transform_0, window_bounds = array<i64: 1, 3>}, {transform_indices = @transform_1, window_bounds = array<i64: 128, 8>}, {transform_indices = @transform_2, window_bounds = array<i64: 128, 128>}, {transform_indices = @transform_3, window_bounds = array<i64: 128, 8>}, {transform_indices = @transform_4, window_bounds = array<i64: 128, 128>}, {transform_indices = @transform_5, window_bounds = array<i64: 128, 8>}, {transform_indices = @transform_6, window_bounds = array<i64: 128, 128>}, {transform_indices = @transform_7, window_bounds = array<i64: 128, 8>}, {pipeline_mode = #tpu.pipeline_mode<synchronous>, transform_indices = @transform_8, window_bounds = array<i64: 8, 128>}, {pipeline_mode = #tpu.pipeline_mode<synchronous>, transform_indices = @transform_9, window_bounds = array<i64: 8, 128>}, {pipeline_mode = #tpu.pipeline_mode<synchronous>, transform_indices = @transform_10, window_bounds = array<i64: 8, 128>}, {pipeline_mode = #tpu.pipeline_mode<synchronous>, transform_indices = @transform_11, window_bounds = array<i64: 1, 128>}, {transform_indices = @transform_12, window_bounds = array<i64: 128, 128>}]} {
    %c0_i32 = arith.constant 0 : i32
    %0 = arith.cmpi eq, %arg1, %c0_i32 : i32
    %1 = arith.extui %0 : i1 to i32
    %c0_i32_0 = arith.constant 0 : i32
    %2 = arith.cmpi ne, %1, %c0_i32_0 : i32
    scf.if %2 {
      %cst_27 = arith.constant 0.000000e+00 : f32
      %24 = vector.broadcast %cst_27 : f32 to vector<128x8xf32>
      %c0_28 = arith.constant 0 : index
      %c0_29 = arith.constant 0 : index
      %25 = vector.load %arg15[%c0_28, %c0_29] : memref<128x8xf32, #tpu.memory_space<vmem>>, vector<128x8xf32>
      tpu.vector_store %arg15[%c0_28, %c0_29], %24 {strides = array<i32>} : memref<128x8xf32, #tpu.memory_space<vmem>>, vector<128x8xf32>,
      %cst_30 = arith.constant 0.000000e+00 : f32
      %26 = vector.broadcast %cst_30 : f32 to vector<128x8xf32>
      %c0_31 = arith.constant 0 : index
      %c0_32 = arith.constant 0 : index
      %27 = vector.load %arg16[%c0_31, %c0_32] : memref<128x8xf32, #tpu.memory_space<vmem>>, vector<128x8xf32>
      tpu.vector_store %arg16[%c0_31, %c0_32], %26 {strides = array<i32>} : memref<128x8xf32, #tpu.memory_space<vmem>>, vector<128x8xf32>,
      %cst_33 = arith.constant 0.000000e+00 : f32
      %28 = vector.broadcast %cst_33 : f32 to vector<128x8xf32>
      %c0_34 = arith.constant 0 : index
      %c0_35 = arith.constant 0 : index
      %29 = vector.load %arg17[%c0_34, %c0_35] : memref<128x8xf32, #tpu.memory_space<vmem>>, vector<128x8xf32>
      tpu.vector_store %arg17[%c0_34, %c0_35], %28 {strides = array<i32>} : memref<128x8xf32, #tpu.memory_space<vmem>>, vector<128x8xf32>,
    } else {
    }
    %c0 = arith.constant 0 : index
    %c0_1 = arith.constant 0 : index
    %3 = vector.load %arg15[%c0, %c0_1] : memref<128x8xf32, #tpu.memory_space<vmem>>, vector<128x8xf32>
    %c0_2 = arith.constant 0 : index
    %c0_3 = arith.constant 0 : index
    %4 = vector.load %arg4[%c0_2, %c0_3] : memref<128x128xf32, #tpu.memory_space<vmem>>, vector<128x128xf32>
    %c0_4 = arith.constant 0 : index
    %c0_5 = arith.constant 0 : index
    %5 = vector.load %arg5[%c0_4, %c0_5] : memref<128x8xf32, #tpu.memory_space<vmem>>, vector<128x8xf32>
    %cst = arith.constant dense<0.000000e+00> : vector<128x8xf32>
    %6 = tpu.matmul %4, %5, %cst {dimension_numbers = #tpu.dot_dimension_numbers<[1], [0], [0], [1], [0, 0, 1, 1], [], []>} : vector<128x128xf32>, vector<128x8xf32>, vector<128x8xf32> -> vector<128x8xf32>
    %7 = arith.addf %3, %6 : vector<128x8xf32>
    %c0_6 = arith.constant 0 : index
    %c0_7 = arith.constant 0 : index
    %8 = vector.load %arg15[%c0_6, %c0_7] : memref<128x8xf32, #tpu.memory_space<vmem>>, vector<128x8xf32>
    tpu.vector_store %arg15[%c0_6, %c0_7], %7 {strides = array<i32>} : memref<128x8xf32, #tpu.memory_space<vmem>>, vector<128x8xf32>,
    %c0_8 = arith.constant 0 : index
    %c0_9 = arith.constant 0 : index
    %9 = vector.load %arg16[%c0_8, %c0_9] : memref<128x8xf32, #tpu.memory_space<vmem>>, vector<128x8xf32>
    %c0_10 = arith.constant 0 : index
    %c0_11 = arith.constant 0 : index
    %10 = vector.load %arg6[%c0_10, %c0_11] : memref<128x128xf32, #tpu.memory_space<vmem>>, vector<128x128xf32>
    %c0_12 = arith.constant 0 : index
    %c0_13 = arith.constant 0 : index
    %11 = vector.load %arg7[%c0_12, %c0_13] : memref<128x8xf32, #tpu.memory_space<vmem>>, vector<128x8xf32>
    %cst_14 = arith.constant dense<0.000000e+00> : vector<128x8xf32>
    %12 = tpu.matmul %10, %11, %cst_14 {dimension_numbers = #tpu.dot_dimension_numbers<[1], [0], [0], [1], [0, 0, 1, 1], [], []>} : vector<128x128xf32>, vector<128x8xf32>, vector<128x8xf32> -> vector<128x8xf32>
    %13 = arith.addf %9, %12 : vector<128x8xf32>
    %c0_15 = arith.constant 0 : index
    %c0_16 = arith.constant 0 : index
    %14 = vector.load %arg16[%c0_15, %c0_16] : memref<128x8xf32, #tpu.memory_space<vmem>>, vector<128x8xf32>
    tpu.vector_store %arg16[%c0_15, %c0_16], %13 {strides = array<i32>} : memref<128x8xf32, #tpu.memory_space<vmem>>, vector<128x8xf32>,
    %c0_17 = arith.constant 0 : index
    %c0_18 = arith.constant 0 : index
    %15 = vector.load %arg17[%c0_17, %c0_18] : memref<128x8xf32, #tpu.memory_space<vmem>>, vector<128x8xf32>
    %c0_19 = arith.constant 0 : index
    %c0_20 = arith.constant 0 : index
    %16 = vector.load %arg8[%c0_19, %c0_20] : memref<128x128xf32, #tpu.memory_space<vmem>>, vector<128x128xf32>
    %c0_21 = arith.constant 0 : index
    %c0_22 = arith.constant 0 : index
    %17 = vector.load %arg9[%c0_21, %c0_22] : memref<128x8xf32, #tpu.memory_space<vmem>>, vector<128x8xf32>
    %cst_23 = arith.constant dense<0.000000e+00> : vector<128x8xf32>
    %18 = tpu.matmul %16, %17, %cst_23 {dimension_numbers = #tpu.dot_dimension_numbers<[1], [0], [0], [1], [0, 0, 1, 1], [], []>} : vector<128x128xf32>, vector<128x8xf32>, vector<128x8xf32> -> vector<128x8xf32>
    %19 = arith.addf %15, %18 : vector<128x8xf32>
    %c0_24 = arith.constant 0 : index
    %c0_25 = arith.constant 0 : index
    %20 = vector.load %arg17[%c0_24, %c0_25] : memref<128x8xf32, #tpu.memory_space<vmem>>, vector<128x8xf32>
    tpu.vector_store %arg17[%c0_24, %c0_25], %19 {strides = array<i32>} : memref<128x8xf32, #tpu.memory_space<vmem>>, vector<128x8xf32>,
    %c2_i32 = arith.constant 2 : i32
    %21 = arith.cmpi eq, %arg1, %c2_i32 : i32
    %22 = arith.extui %21 : i1 to i32
    %c0_i32_26 = arith.constant 0 : i32
    %23 = arith.cmpi ne, %22, %c0_i32_26 : i32
    scf.if %23 {
      %c0_27 = arith.constant 0 : index
      %c0_28 = arith.constant 0 : index
      %24 = memref.load %arg2[%c0_27, %c0_28] : memref<1x3xf32, #tpu.memory_space<smem>>
      %cst_29 = arith.constant 1.010000e+00 : f32
      %25 = arith.mulf %cst_29, %24 : f32
      %c0_30 = arith.constant 0 : index
      %c1 = arith.constant 1 : index
      %26 = memref.load %arg2[%c0_30, %c1] : memref<1x3xf32, #tpu.memory_space<smem>>
      %cst_31 = arith.constant 1.010000e+00 : f32
      %27 = arith.mulf %cst_31, %26 : f32
      %c0_32 = arith.constant 0 : index
      %c2 = arith.constant 2 : index
      %28 = memref.load %arg2[%c0_32, %c2] : memref<1x3xf32, #tpu.memory_space<smem>>
      %cst_33 = arith.constant 1.010000e+00 : f32
      %29 = arith.mulf %cst_33, %28 : f32
      %c0_34 = arith.constant 0 : index
      %c0_35 = arith.constant 0 : index
      %30 = vector.load %arg3[%c0_34, %c0_35] : memref<128x8xf32, #tpu.memory_space<vmem>>, vector<128x8xf32>
      %c0_36 = arith.constant 0 : index
      %c0_37 = arith.constant 0 : index
      %31 = vector.load %arg10[%c0_36, %c0_37] : memref<8x128xf32, #tpu.memory_space<vmem>>, vector<8x128xf32>
      %cst_38 = arith.constant dense<0.000000e+00> : vector<128x128xf32>
      %32 = tpu.matmul %30, %31, %cst_38 {dimension_numbers = #tpu.dot_dimension_numbers<[1], [0], [0], [1], [0, 0, 1, 1], [], []>} : vector<128x8xf32>, vector<8x128xf32>, vector<128x128xf32> -> vector<128x128xf32>
      %c0_39 = arith.constant 0 : index
      %c0_40 = arith.constant 0 : index
      %33 = vector.load %arg15[%c0_39, %c0_40] : memref<128x8xf32, #tpu.memory_space<vmem>>, vector<128x8xf32>
      %34 = vector.broadcast %25 : f32 to vector<128x8xf32>
      %35 = arith.mulf %34, %33 : vector<128x8xf32>
      %c0_41 = arith.constant 0 : index
      %c0_42 = arith.constant 0 : index
      %36 = vector.load %arg10[%c0_41, %c0_42] : memref<8x128xf32, #tpu.memory_space<vmem>>, vector<8x128xf32>
      %cst_43 = arith.constant dense<0.000000e+00> : vector<128x128xf32>
      %37 = tpu.matmul %35, %36, %cst_43 {dimension_numbers = #tpu.dot_dimension_numbers<[1], [0], [0], [1], [0, 0, 1, 1], [], []>} : vector<128x8xf32>, vector<8x128xf32>, vector<128x128xf32> -> vector<128x128xf32>
      %c0_44 = arith.constant 0 : index
      %c0_45 = arith.constant 0 : index
      %38 = vector.load %arg16[%c0_44, %c0_45] : memref<128x8xf32, #tpu.memory_space<vmem>>, vector<128x8xf32>
      %39 = vector.broadcast %27 : f32 to vector<128x8xf32>
      %40 = arith.mulf %39, %38 : vector<128x8xf32>
      %c0_46 = arith.constant 0 : index
      %c0_47 = arith.constant 0 : index
      %41 = vector.load %arg11[%c0_46, %c0_47] : memref<8x128xf32, #tpu.memory_space<vmem>>, vector<8x128xf32>
      %cst_48 = arith.constant dense<0.000000e+00> : vector<128x128xf32>
      %42 = tpu.matmul %40, %41, %cst_48 {dimension_numbers = #tpu.dot_dimension_numbers<[1], [0], [0], [1], [0, 0, 1, 1], [], []>} : vector<128x8xf32>, vector<8x128xf32>, vector<128x128xf32> -> vector<128x128xf32>
      %c0_49 = arith.constant 0 : index
      %c0_50 = arith.constant 0 : index
      %43 = vector.load %arg17[%c0_49, %c0_50] : memref<128x8xf32, #tpu.memory_space<vmem>>, vector<128x8xf32>
      %44 = vector.broadcast %29 : f32 to vector<128x8xf32>
      %45 = arith.mulf %44, %43 : vector<128x8xf32>
      %c0_51 = arith.constant 0 : index
      %c0_52 = arith.constant 0 : index
      %46 = vector.load %arg12[%c0_51, %c0_52] : memref<8x128xf32, #tpu.memory_space<vmem>>, vector<8x128xf32>
      %cst_53 = arith.constant dense<0.000000e+00> : vector<128x128xf32>
      %47 = tpu.matmul %45, %46, %cst_53 {dimension_numbers = #tpu.dot_dimension_numbers<[1], [0], [0], [1], [0, 0, 1, 1], [], []>} : vector<128x8xf32>, vector<8x128xf32>, vector<128x128xf32> -> vector<128x128xf32>
      %48 = arith.addf %32, %37 : vector<128x128xf32>
      %49 = arith.addf %48, %42 : vector<128x128xf32>
      %50 = arith.addf %49, %47 : vector<128x128xf32>
      %c0_54 = arith.constant 0 : index
      %c0_55 = arith.constant 0 : index
      %51 = vector.load %arg13[%c0_54, %c0_55] : memref<1x128xf32, #tpu.memory_space<vmem>>, vector<1x128xf32>
      %52 = vector.broadcast %51 : vector<1x128xf32> to vector<128x128xf32>
      %53 = arith.addf %50, %52 : vector<128x128xf32>
      %c0_56 = arith.constant 0 : index
      %c0_57 = arith.constant 0 : index
      %54 = vector.load %arg14[%c0_56, %c0_57] : memref<128x128xf32, #tpu.memory_space<vmem>>, vector<128x128xf32>
      tpu.vector_store %arg14[%c0_56, %c0_57], %53 {strides = array<i32>} : memref<128x128xf32, #tpu.memory_space<vmem>>, vector<128x128xf32>,
    } else {
    }
    return
  }
  func.func @transform_0(%arg0: i32, %arg1: i32) -> (i32, i32) {
    %c0_i32 = arith.constant 0 : i32
    %c0_i32_0 = arith.constant 0 : i32
    %c0_i32_1 = arith.constant 0 : i32
    return %c0_i32, %c0_i32_0 : i32, i32
  }
  func.func @transform_1(%arg0: i32, %arg1: i32) -> (i32, i32) {
    %c0_i32 = arith.constant 0 : i32
    %c0_i32_0 = arith.constant 0 : i32
    return %arg0, %c0_i32 : i32, i32
  }
  func.func @transform_2(%arg0: i32, %arg1: i32) -> (i32, i32) {
    %c0_i32 = arith.constant 0 : i32
    return %arg0, %arg1 : i32, i32
  }
  func.func @transform_3(%arg0: i32, %arg1: i32) -> (i32, i32) {
    %c0_i32 = arith.constant 0 : i32
    %c0_i32_0 = arith.constant 0 : i32
    return %arg1, %c0_i32 : i32, i32
  }
  func.func @transform_4(%arg0: i32, %arg1: i32) -> (i32, i32) {
    %c0_i32 = arith.constant 0 : i32
    return %arg0, %arg1 : i32, i32
  }
  func.func @transform_5(%arg0: i32, %arg1: i32) -> (i32, i32) {
    %c0_i32 = arith.constant 0 : i32
    %c0_i32_0 = arith.constant 0 : i32
    return %arg1, %c0_i32 : i32, i32
  }
  func.func @transform_6(%arg0: i32, %arg1: i32) -> (i32, i32) {
    %c0_i32 = arith.constant 0 : i32
    return %arg0, %arg1 : i32, i32
  }
  func.func @transform_7(%arg0: i32, %arg1: i32) -> (i32, i32) {
    %c0_i32 = arith.constant 0 : i32
    %c0_i32_0 = arith.constant 0 : i32
    return %arg1, %c0_i32 : i32, i32
  }
  func.func @transform_8(%arg0: i32, %arg1: i32) -> (i32, i32) {
    %c0_i32 = arith.constant 0 : i32
    %c0_i32_0 = arith.constant 0 : i32
    %c0_i32_1 = arith.constant 0 : i32
    return %c0_i32, %c0_i32_0 : i32, i32
  }
  func.func @transform_9(%arg0: i32, %arg1: i32) -> (i32, i32) {
    %c0_i32 = arith.constant 0 : i32
    %c0_i32_0 = arith.constant 0 : i32
    %c0_i32_1 = arith.constant 0 : i32
    return %c0_i32, %c0_i32_0 : i32, i32
  }
  func.func @transform_10(%arg0: i32, %arg1: i32) -> (i32, i32) {
    %c0_i32 = arith.constant 0 : i32
    %c0_i32_0 = arith.constant 0 : i32
    %c0_i32_1 = arith.constant 0 : i32
    return %c0_i32, %c0_i32_0 : i32, i32
  }
  func.func @transform_11(%arg0: i32, %arg1: i32) -> (i32, i32) {
    %c0_i32 = arith.constant 0 : i32
    %c0_i32_0 = arith.constant 0 : i32
    %c0_i32_1 = arith.constant 0 : i32
    return %c0_i32, %c0_i32_0 : i32, i32
  }
  func.func @transform_12(%arg0: i32, %arg1: i32) -> (i32, i32) {
    %c0_i32 = arith.constant 0 : i32
    %c0_i32_0 = arith.constant 0 : i32
    return %arg0, %c0_i32 : i32, i32
  }
}

</mosaic_0001>

<llo_original>
// kernel: tpu_custom_call.1
$region0: #{tpu_custom_call.1}
  #allocation0 [shape = 'u32[]', space=smem, size = 0x4, offset = 0x4, fixed_abs, tag = 'smem constant byte address 0x4 - core index']
  #allocation1 [shape = 'u32[72,128]{1,0:T(1,128)}', space=vmem, size = 0x9000, scoped, tag = 'internal scratch']
  #allocation2 [shape = 'f32[128,8]{1,0:T(8,128)}', space=vmem, size = 0x10000, scoped, tag = 'scratch operand']
  #allocation3 [shape = 'f32[128,8]{1,0:T(8,128)}', space=vmem, size = 0x10000, scoped, tag = 'scratch operand']
  #allocation4 [shape = 'f32[128,8]{1,0:T(8,128)}', space=vmem, size = 0x10000, scoped, tag = 'scratch operand']
  %s0 = inlined_call_operand.vmem [shape: f32[1,3], index: 0, kind: input, shape index: {}]
  %s1 = inlined_call_operand.vmem [shape: f32[384,8], index: 1, kind: input, shape index: {}]
  %s2 = inlined_call_operand.hbm [shape: f32[384,384], index: 2, kind: input, shape index: {}]
  %s3 = inlined_call_operand.vmem [shape: f32[384,8], index: 3, kind: input, shape index: {}]
  %s4 = inlined_call_operand.hbm [shape: f32[384,384], index: 4, kind: input, shape index: {}]
  %s5 = inlined_call_operand.vmem [shape: f32[384,8], index: 5, kind: input, shape index: {}]
  %s6 = inlined_call_operand.hbm [shape: f32[384,384], index: 6, kind: input, shape index: {}]
  %s7 = inlined_call_operand.vmem [shape: f32[384,8], index: 7, kind: input, shape index: {}]
  %s8 = inlined_call_operand.vmem [shape: f32[8,128], index: 8, kind: input, shape index: {}]
  %s9 = inlined_call_operand.vmem [shape: f32[8,128], index: 9, kind: input, shape index: {}]
  %s10 = inlined_call_operand.vmem [shape: f32[8,128], index: 10, kind: input, shape index: {}]
  %s11 = inlined_call_operand.vmem [shape: f32[1,128], index: 11, kind: input, shape index: {}]
  %s12 = inlined_call_operand.hbm [shape: f32[384,128], index: 12, kind: output, shape index: {}]
  %s13 = sld [smem:[#allocation0]]
  $region105: #{tpu_custom_call.1} parent=0
    _
  %s15 = ssub.s32 1, %s13
  %s16 = scalar_select 0, %s15, %s13
  $region1: #{tpu_custom_call.1} parent=0
    #allocation5 [shape = 'u8[512]{0}', space=smem, size = 0x200, scoped, tag = 'input window, operand 0, single buffered']
    #allocation6 [shape = 's32[2]{0}', space=sflag, size = 0x8, scoped, tag = 'scoped memory for tpu_custom_call.1']
    #allocation7 [shape = 's32[2]{0}', space=sflag, size = 0x8, scoped, tag = 'scoped memory for tpu_custom_call.1']
    #allocation8 [shape = 's32[2]{0}', space=sflag, size = 0x8, scoped, tag = 'scoped memory for tpu_custom_call.1']
    #allocation9 [shape = 'u8[131072]{0}', space=vmem, size = 0x20000, scoped, tag = 'input window, operand 2']
    #allocation10 [shape = 'u8[131072]{0}', space=vmem, size = 0x20000, scoped, tag = 'input window, operand 4']
    #allocation11 [shape = 's32[2]{0}', space=sflag, size = 0x8, scoped, tag = 'scoped memory for tpu_custom_call.1']
    #allocation12 [shape = 'u8[131072]{0}', space=vmem, size = 0x20000, scoped, tag = 'input window, operand 6']
    #allocation13 [shape = 'u8[131072]{0}', space=vmem, size = 0x20000, scoped, tag = 'output window, operand 0']
    %17 = vsyncpa [#allocation8], 0
    %18 = vsyncpa [#allocation6], 0
    %s19 = scalar_lea.sflag [#allocation6], 1
    %20 = vsyncpa %s19, 0
    %21 = vsyncpa [#allocation11], 0
    %s22 = scalar_lea.sflag [#allocation11], 1
    %23 = vsyncpa %s22, 0
    %24 = vsyncpa [#allocation7], 0
    %s25 = scalar_lea.sflag [#allocation7], 1
    %26 = vsyncpa %s25, 0
    loop: start=0, step=1, limit=11
    $region2: #{tpu_custom_call.1} parent=1 // loop_pre_header
      _
    $region3: #{tpu_custom_call.1} parent=1 // loop_header
      %s28 = sphi 0, %s32
      %p29 = scmp.ge.s32.totalorder %s28, 11
      %s35 = sphi 0, %s47
      %s36 = sphi 0, %s43
      %s37 = sphi 0, %s35
      %s38 = sphi 0, %s36
      %s39 = sphi 0, %s37
      %s40 = sphi 0, %s38
      %s48 = sphi 0, %s48
      %s50 = sphi 0, %s48
      %s51 = sphi 0, %s50
      %s65 = sphi 0, %s51
      %s71 = sphi 0, %s73
      %s74 = sphi 0, %s71
      %s75 = sphi 0, %s74
      %s91 = sphi 0, %s75
      %s99 = sphi 0, %s101
      %s102 = sphi 0, %s99
      %s103 = sphi 0, %s102
      %s119 = sphi 0, %s103
      %s125 = sphi 0, %s127
      %s128 = sphi 0, %s125
      %s129 = sphi 0, %s128
      %s145 = sphi 0, %s129
      %s153 = sphi 0, %s155
      %s156 = sphi 0, %s153
      %s157 = sphi 0, %s156
      %s173 = sphi 0, %s157
      %s179 = sphi 0, %s181
      %s182 = sphi 0, %s179
      %s183 = sphi 0, %s182
      %s199 = sphi 0, %s183
      %s207 = sphi 0, %s209
      %s210 = sphi 0, %s207
      %s211 = sphi 0, %s210
      %s227 = sphi 0, %s211
      %s233 = sphi 0, %s235
      %s236 = sphi 0, %s233
      %s237 = sphi 0, %s236
      %s253 = sphi 0, %s237
      %s257 = sphi 0, %s257
      %s259 = sphi 0, %s257
      %s260 = sphi 0, %s259
      %s274 = sphi 0, %s260
      %s278 = sphi 0, %s278
      %s280 = sphi 0, %s278
      %s281 = sphi 0, %s280
      %s295 = sphi 0, %s281
      %s299 = sphi 0, %s299
      %s301 = sphi 0, %s299
      %s302 = sphi 0, %s301
      %s316 = sphi 0, %s302
      %s320 = sphi 0, %s320
      %s322 = sphi 0, %s320
      %s323 = sphi 0, %s322
      %s337 = sphi 0, %s323
      %s343 = sphi 0, %s345
      %s346 = sphi 0, %s343
      %s347 = sphi 0, %s346
      %s363 = sphi 0, %s347
    $region4: #{tpu_custom_call.1} parent=1 // loop_header_branch
      %31 = sbr.rel (%p29) target = $region8
    $region5: #{tpu_custom_call.1} parent=1 // loop_body
      %s33 = ssub.s32 %s28, 1
      %s34 = ssub.s32 %s28, 2
      %s41 = sadd.s32 1, %s36
      %p42 = scmp.ge.s32.totalorder %s41, 3
      %s43 = scalar_select %p42, 0, %s41
      %s44 = sadd.s32 1, %s35
      %s45 = scalar_select %p42, %s44, %s35
      %p46 = scmp.ge.s32.totalorder %s45, 3
      %s47 = scalar_select %p46, 0, %s45
      %s49 = sadd.s32 %s48, 1
      %p52 = scmp.eq.s32.totalorder %s28, 8
      %p53 = scmp.ne.s32.totalorder %s48, %s50
      %p54 = scmp.eq.s32.totalorder %s28, 0
      %p55 = por %p53, %p54
      %p56 = scmp.ne.s32.totalorder %s48, %s50
      %p57 = scmp.eq.s32.totalorder %s33, 8
      %p58 = por %p56, %p57
      %p59 = scmp.ne.s32.totalorder %s50, %s51
      %p60 = scmp.eq.s32.totalorder %s33, 0
      %p61 = por %p59, %p60
      %p62 = scmp.ne.s32.totalorder %s50, %s51
      %p63 = scmp.eq.s32.totalorder %s34, 8
      %p64 = por %p62, %p63
      %p66 = scmp.ne.s32.totalorder %s51, %s65
      %p67 = scmp.eq.s32.totalorder %s34, 0
      %p68 = por %p66, %p67
      %s69 = ssub.s32 %s35, %s47
      %p70 = scmp.eq.s32.totalorder %s69, 0
      %s72 = sadd.s32 %s71, 1
      %s73 = scalar_select %p70, %s71, %s72
      %p76 = pneg %p70
      %p77 = scmp.eq.s32.totalorder %s28, 8
      %p78 = por %p76, %p77
      %p79 = scmp.ne.s32.totalorder %s71, %s74
      %p80 = scmp.eq.s32.totalorder %s28, 0
      %p81 = por %p79, %p80
      %p82 = scmp.ne.s32.totalorder %s71, %s74
      %p83 = scmp.eq.s32.totalorder %s33, 8
      %p84 = por %p82, %p83
      %p85 = scmp.ne.s32.totalorder %s74, %s75
      %p86 = scmp.eq.s32.totalorder %s33, 0
      %p87 = por %p85, %p86
      %p88 = scmp.ne.s32.totalorder %s74, %s75
      %p89 = scmp.eq.s32.totalorder %s34, 8
      %p90 = por %p88, %p89
      %p92 = scmp.ne.s32.totalorder %s75, %s91
      %p93 = scmp.eq.s32.totalorder %s34, 0
      %p94 = por %p92, %p93
      %s95 = ssub.s32 %s35, %s47
      %s96 = ssub.s32 %s36, %s43
      %s97 = sor.u32 %s95, %s96
      %p98 = scmp.eq.s32.totalorder %s97, 0
      %s100 = sadd.s32 %s99, 1
      %s101 = scalar_select %p98, %s99, %s100
      %p104 = pneg %p98
      %p105 = scmp.eq.s32.totalorder %s28, 8
      %p106 = por %p104, %p105
      %p107 = scmp.ne.s32.totalorder %s99, %s102
      %p108 = scmp.eq.s32.totalorder %s28, 0
      %p109 = por %p107, %p108
      %p110 = scmp.ne.s32.totalorder %s99, %s102
      %p111 = scmp.eq.s32.totalorder %s33, 8
      %p112 = por %p110, %p111
      %p113 = scmp.ne.s32.totalorder %s102, %s103
      %p114 = scmp.eq.s32.totalorder %s33, 0
      %p115 = por %p113, %p114
      %p116 = scmp.ne.s32.totalorder %s102, %s103
      %p117 = scmp.eq.s32.totalorder %s34, 8
      %p118 = por %p116, %p117
      %p120 = scmp.ne.s32.totalorder %s103, %s119
      %p121 = scmp.eq.s32.totalorder %s34, 0
      %p122 = por %p120, %p121
      %s123 = ssub.s32 %s36, %s43
      %p124 = scmp.eq.s32.totalorder %s123, 0
      %s126 = sadd.s32 %s125, 1
      %s127 = scalar_select %p124, %s125, %s126
      %p130 = pneg %p124
      %p131 = scmp.eq.s32.totalorder %s28, 8
      %p132 = por %p130, %p131
      %p133 = scmp.ne.s32.totalorder %s125, %s128
      %p134 = scmp.eq.s32.totalorder %s28, 0
      %p135 = por %p133, %p134
      %p136 = scmp.ne.s32.totalorder %s125, %s128
      %p137 = scmp.eq.s32.totalorder %s33, 8
      %p138 = por %p136, %p137
      %p139 = scmp.ne.s32.totalorder %s128, %s129
      %p140 = scmp.eq.s32.totalorder %s33, 0
      %p141 = por %p139, %p140
      %p142 = scmp.ne.s32.totalorder %s128, %s129
      %p143 = scmp.eq.s32.totalorder %s34, 8
      %p144 = por %p142, %p143
      %p146 = scmp.ne.s32.totalorder %s129, %s145
      %p147 = scmp.eq.s32.totalorder %s34, 0
      %p148 = por %p146, %p147
      %s149 = ssub.s32 %s35, %s47
      %s150 = ssub.s32 %s36, %s43
      %s151 = sor.u32 %s149, %s150
      %p152 = scmp.eq.s32.totalorder %s151, 0
      %s154 = sadd.s32 %s153, 1
      %s155 = scalar_select %p152, %s153, %s154
      %p158 = pneg %p152
      %p159 = scmp.eq.s32.totalorder %s28, 8
      %p160 = por %p158, %p159
      %p161 = scmp.ne.s32.totalorder %s153, %s156
      %p162 = scmp.eq.s32.totalorder %s28, 0
      %p163 = por %p161, %p162
      %p164 = scmp.ne.s32.totalorder %s153, %s156
      %p165 = scmp.eq.s32.totalorder %s33, 8
      %p166 = por %p164, %p165
      %p167 = scmp.ne.s32.totalorder %s156, %s157
      %p168 = scmp.eq.s32.totalorder %s33, 0
      %p169 = por %p167, %p168
      %p170 = scmp.ne.s32.totalorder %s156, %s157
      %p171 = scmp.eq.s32.totalorder %s34, 8
      %p172 = por %p170, %p171
      %p174 = scmp.ne.s32.totalorder %s157, %s173
      %p175 = scmp.eq.s32.totalorder %s34, 0
      %p176 = por %p174, %p175
      %s177 = ssub.s32 %s36, %s43
      %p178 = scmp.eq.s32.totalorder %s177, 0
      %s180 = sadd.s32 %s179, 1
      %s181 = scalar_select %p178, %s179, %s180
      %p184 = pneg %p178
      %p185 = scmp.eq.s32.totalorder %s28, 8
      %p186 = por %p184, %p185
      %p187 = scmp.ne.s32.totalorder %s179, %s182
      %p188 = scmp.eq.s32.totalorder %s28, 0
      %p189 = por %p187, %p188
      %p190 = scmp.ne.s32.totalorder %s179, %s182
      %p191 = scmp.eq.s32.totalorder %s33, 8
      %p192 = por %p190, %p191
      %p193 = scmp.ne.s32.totalorder %s182, %s183
      %p194 = scmp.eq.s32.totalorder %s33, 0
      %p195 = por %p193, %p194
      %p196 = scmp.ne.s32.totalorder %s182, %s183
      %p197 = scmp.eq.s32.totalorder %s34, 8
      %p198 = por %p196, %p197
      %p200 = scmp.ne.s32.totalorder %s183, %s199
      %p201 = scmp.eq.s32.totalorder %s34, 0
      %p202 = por %p200, %p201
      %s203 = ssub.s32 %s35, %s47
      %s204 = ssub.s32 %s36, %s43
      %s205 = sor.u32 %s203, %s204
      %p206 = scmp.eq.s32.totalorder %s205, 0
      %s208 = sadd.s32 %s207, 1
      %s209 = scalar_select %p206, %s207, %s208
      %p212 = pneg %p206
      %p213 = scmp.eq.s32.totalorder %s28, 8
      %p214 = por %p212, %p213
      %p215 = scmp.ne.s32.totalorder %s207, %s210
      %p216 = scmp.eq.s32.totalorder %s28, 0
      %p217 = por %p215, %p216
      %p218 = scmp.ne.s32.totalorder %s207, %s210
      %p219 = scmp.eq.s32.totalorder %s33, 8
      %p220 = por %p218, %p219
      %p221 = scmp.ne.s32.totalorder %s210, %s211
      %p222 = scmp.eq.s32.totalorder %s33, 0
      %p223 = por %p221, %p222
      %p224 = scmp.ne.s32.totalorder %s210, %s211
      %p225 = scmp.eq.s32.totalorder %s34, 8
      %p226 = por %p224, %p225
      %p228 = scmp.ne.s32.totalorder %s211, %s227
      %p229 = scmp.eq.s32.totalorder %s34, 0
      %p230 = por %p228, %p229
      %s231 = ssub.s32 %s36, %s43
      %p232 = scmp.eq.s32.totalorder %s231, 0
      %s234 = sadd.s32 %s233, 1
      %s235 = scalar_select %p232, %s233, %s234
      %p238 = pneg %p232
      %p239 = scmp.eq.s32.totalorder %s28, 8
      %p240 = por %p238, %p239
      %p241 = scmp.ne.s32.totalorder %s233, %s236
      %p242 = scmp.eq.s32.totalorder %s28, 0
      %p243 = por %p241, %p242
      %p244 = scmp.ne.s32.totalorder %s233, %s236
      %p245 = scmp.eq.s32.totalorder %s33, 8
      %p246 = por %p244, %p245
      %p247 = scmp.ne.s32.totalorder %s236, %s237
      %p248 = scmp.eq.s32.totalorder %s33, 0
      %p249 = por %p247, %p248
      %p250 = scmp.ne.s32.totalorder %s236, %s237
      %p251 = scmp.eq.s32.totalorder %s34, 8
      %p252 = por %p250, %p251
      %p254 = scmp.ne.s32.totalorder %s237, %s253
      %p255 = scmp.eq.s32.totalorder %s34, 0
      %p256 = por %p254, %p255
      %s258 = sadd.s32 %s257, 1
      %p261 = scmp.eq.s32.totalorder %s28, 8
      %p262 = scmp.ne.s32.totalorder %s257, %s259
      %p263 = scmp.eq.s32.totalorder %s28, 0
      %p264 = por %p262, %p263
      %p265 = scmp.ne.s32.totalorder %s257, %s259
      %p266 = scmp.eq.s32.totalorder %s33, 8
      %p267 = por %p265, %p266
      %p268 = scmp.ne.s32.totalorder %s259, %s260
      %p269 = scmp.eq.s32.totalorder %s33, 0
      %p270 = por %p268, %p269
      %p271 = scmp.ne.s32.totalorder %s259, %s260
      %p272 = scmp.eq.s32.totalorder %s34, 8
      %p273 = por %p271, %p272
      %p275 = scmp.ne.s32.totalorder %s260, %s274
      %p276 = scmp.eq.s32.totalorder %s34, 0
      %p277 = por %p275, %p276
      %s279 = sadd.s32 %s278, 1
      %p282 = scmp.eq.s32.totalorder %s28, 8
      %p283 = scmp.ne.s32.totalorder %s278, %s280
      %p284 = scmp.eq.s32.totalorder %s28, 0
      %p285 = por %p283, %p284
      %p286 = scmp.ne.s32.totalorder %s278, %s280
      %p287 = scmp.eq.s32.totalorder %s33, 8
      %p288 = por %p286, %p287
      %p289 = scmp.ne.s32.totalorder %s280, %s281
      %p290 = scmp.eq.s32.totalorder %s33, 0
      %p291 = por %p289, %p290
      %p292 = scmp.ne.s32.totalorder %s280, %s281
      %p293 = scmp.eq.s32.totalorder %s34, 8
      %p294 = por %p292, %p293
      %p296 = scmp.ne.s32.totalorder %s281, %s295
      %p297 = scmp.eq.s32.totalorder %s34, 0
      %p298 = por %p296, %p297
      %s300 = sadd.s32 %s299, 1
      %p303 = scmp.eq.s32.totalorder %s28, 8
      %p304 = scmp.ne.s32.totalorder %s299, %s301
      %p305 = scmp.eq.s32.totalorder %s28, 0
      %p306 = por %p304, %p305
      %p307 = scmp.ne.s32.totalorder %s299, %s301
      %p308 = scmp.eq.s32.totalorder %s33, 8
      %p309 = por %p307, %p308
      %p310 = scmp.ne.s32.totalorder %s301, %s302
      %p311 = scmp.eq.s32.totalorder %s33, 0
      %p312 = por %p310, %p311
      %p313 = scmp.ne.s32.totalorder %s301, %s302
      %p314 = scmp.eq.s32.totalorder %s34, 8
      %p315 = por %p313, %p314
      %p317 = scmp.ne.s32.totalorder %s302, %s316
      %p318 = scmp.eq.s32.totalorder %s34, 0
      %p319 = por %p317, %p318
      %s321 = sadd.s32 %s320, 1
      %p324 = scmp.eq.s32.totalorder %s28, 8
      %p325 = scmp.ne.s32.totalorder %s320, %s322
      %p326 = scmp.eq.s32.totalorder %s28, 0
      %p327 = por %p325, %p326
      %p328 = scmp.ne.s32.totalorder %s320, %s322
      %p329 = scmp.eq.s32.totalorder %s33, 8
      %p330 = por %p328, %p329
      %p331 = scmp.ne.s32.totalorder %s322, %s323
      %p332 = scmp.eq.s32.totalorder %s33, 0
      %p333 = por %p331, %p332
      %p334 = scmp.ne.s32.totalorder %s322, %s323
      %p335 = scmp.eq.s32.totalorder %s34, 8
      %p336 = por %p334, %p335
      %p338 = scmp.ne.s32.totalorder %s323, %s337
      %p339 = scmp.eq.s32.totalorder %s34, 0
      %p340 = por %p338, %p339
      %s341 = ssub.s32 %s35, %s47
      %p342 = scmp.eq.s32.totalorder %s341, 0
      %s344 = sadd.s32 %s343, 1
      %s345 = scalar_select %p342, %s343, %s344
      %p348 = pneg %p342
      %p349 = scmp.eq.s32.totalorder %s28, 8
      %p350 = por %p348, %p349
      %p351 = scmp.ne.s32.totalorder %s343, %s346
      %p352 = scmp.eq.s32.totalorder %s28, 0
      %p353 = por %p351, %p352
      %p354 = scmp.ne.s32.totalorder %s343, %s346
      %p355 = scmp.eq.s32.totalorder %s33, 8
      %p356 = por %p354, %p355
      %p357 = scmp.ne.s32.totalorder %s346, %s347
      %p358 = scmp.eq.s32.totalorder %s33, 0
      %p359 = por %p357, %p358
      %p360 = scmp.ne.s32.totalorder %s346, %s347
      %p361 = scmp.eq.s32.totalorder %s34, 8
      %p362 = por %p360, %p361
      %p364 = scmp.ne.s32.totalorder %s347, %s363
      %p365 = scmp.eq.s32.totalorder %s34, 0
      %p366 = por %p364, %p365
      %p367 = scmp.le.s32.totalorder 1, %s28
      %p368 = scmp.lt.s32.totalorder %s28, 10
      %p369 = pnand %p367, %p368
      %p370 = pneg %p369
      // Predicated region
      $region9: #{tpu_custom_call.1} parent=5 // pred_check
        _
      $region10: #{tpu_custom_call.1} parent=5 // pred_check_branch
        %372 = sbr.rel (%p369) target = $region12
      $region11: #{tpu_custom_call.1} parent=5 // pred_region
        %s373 = ssub.s32 %s28, 1
        // Predicated region
        $region13: #{tpu_custom_call.1} parent=11 // pred_check
          %p374 = pneg %p61
        $region14: #{tpu_custom_call.1} parent=11 // pred_check_branch
          %376 = sbr.rel (%p374) target = $region16
        $region15: #{tpu_custom_call.1} parent=11 // pred_region
          %378 = vsyncadd [#allocation8], 0
          %s380 = sshll.u32 %s0, 4
          %s381 = int_to_ptr.vmem [resolvable:$true] %s380
          %383 = dma.vmem_to_smem %s381, 16, [#allocation5], [#allocation8]
        $region16: #{tpu_custom_call.1} parent=11 // pred_fallthru
          _
        // Predicated region
        $region17: #{tpu_custom_call.1} parent=11 // pred_check
          %p384 = pneg %p270
        $region18: #{tpu_custom_call.1} parent=11 // pred_check_branch
          %386 = sbr.rel (%p384) target = $region20
        $region19: #{tpu_custom_call.1} parent=11 // pred_region
          _
        $region20: #{tpu_custom_call.1} parent=11 // pred_fallthru
          _
        // Predicated region
        $region21: #{tpu_custom_call.1} parent=11 // pred_check
          %p387 = pneg %p291
        $region22: #{tpu_custom_call.1} parent=11 // pred_check_branch
          %389 = sbr.rel (%p387) target = $region24
        $region23: #{tpu_custom_call.1} parent=11 // pred_region
          _
        $region24: #{tpu_custom_call.1} parent=11 // pred_fallthru
          _
        // Predicated region
        $region25: #{tpu_custom_call.1} parent=11 // pred_check
          %p390 = pneg %p312
        $region26: #{tpu_custom_call.1} parent=11 // pred_check_branch
          %392 = sbr.rel (%p390) target = $region28
        $region27: #{tpu_custom_call.1} parent=11 // pred_region
          _
        $region28: #{tpu_custom_call.1} parent=11 // pred_fallthru
          _
        // Predicated region
        $region29: #{tpu_custom_call.1} parent=11 // pred_check
          %p393 = pneg %p333
        $region30: #{tpu_custom_call.1} parent=11 // pred_check_branch
          %395 = sbr.rel (%p393) target = $region32
        $region31: #{tpu_custom_call.1} parent=11 // pred_region
          _
        $region32: #{tpu_custom_call.1} parent=11 // pred_fallthru
          _
      $region12: #{tpu_custom_call.1} parent=5 // pred_fallthru
        _
      %p396 = scmp.lt.s32.totalorder %s28, 9
      // Predicated region
      $region33: #{tpu_custom_call.1} parent=5 // pred_check
        %p397 = pneg %p396
      $region34: #{tpu_custom_call.1} parent=5 // pred_check_branch
        %399 = sbr.rel (%p397) target = $region36
      $region35: #{tpu_custom_call.1} parent=5 // pred_region
        // Predicated region
        $region37: #{tpu_custom_call.1} parent=35 // pred_check
          %p400 = pneg %p81
        $region38: #{tpu_custom_call.1} parent=35 // pred_check_branch
          %402 = sbr.rel (%p400) target = $region40
        $region39: #{tpu_custom_call.1} parent=35 // pred_region
          %s403 = smul.u32 16, %s35
          %p404 = scmp.lt.s32.totalorder %s403, 47
          %s405 = scalar_select %p404, %s403, 47
          %s406 = smul.addr %s405, 8
          %s407 = scalar_lea.vmem %s1, %s406
          %s408 = smul.u32 16, %s35
        $region40: #{tpu_custom_call.1} parent=35 // pred_fallthru
          _
        // Predicated region
        $region41: #{tpu_custom_call.1} parent=35 // pred_check
          %p409 = pneg %p109
        $region42: #{tpu_custom_call.1} parent=35 // pred_check_branch
          %411 = sbr.rel (%p409) target = $region44
        $region43: #{tpu_custom_call.1} parent=35 // pred_region
          %s412 = sand.u32 %s99, 1
          %s413 = scalar_lea.sflag [#allocation6], %s412
          %s414 = sand.u32 %s99, 1
          %s415 = smul.addr %s414, 128
          %s416 = scalar_lea.vmem [#allocation9], %s415
          %s417 = smul.u32 16, %s35
          %419 = vsyncadd %s413, 0
          %s420 = smul.addr %s417, 3
          %s421 = sadd.s32 %s36, %s420
          %s422 = smul.addr %s421, 8
          %s423 = scalar_lea.hbm %s2, %s422
          %s424 = sshll.u32 %s423, 4
          %s425 = int_to_ptr.hbm [resolvable:$true] %s424
          %s426 = sshll.u32 %s416, 4
          %s427 = int_to_ptr.vmem [resolvable:$true] %s426
          %432 = dma.hbm_to_vmem [thread:$0]  %s425, 2048, %s427, %s413, 384, 128, 8
        $region44: #{tpu_custom_call.1} parent=35 // pred_fallthru
          _
        // Predicated region
        $region45: #{tpu_custom_call.1} parent=35 // pred_check
          %p433 = pneg %p135
        $region46: #{tpu_custom_call.1} parent=35 // pred_check_branch
          %435 = sbr.rel (%p433) target = $region48
        $region47: #{tpu_custom_call.1} parent=35 // pred_region
          %s436 = smul.u32 16, %s36
          %p437 = scmp.lt.s32.totalorder %s436, 47
          %s438 = scalar_select %p437, %s436, 47
          %s439 = smul.addr %s438, 8
          %s440 = scalar_lea.vmem %s3, %s439
          %s441 = smul.u32 16, %s36
        $region48: #{tpu_custom_call.1} parent=35 // pred_fallthru
          _
        // Predicated region
        $region49: #{tpu_custom_call.1} parent=35 // pred_check
          %p442 = pneg %p163
        $region50: #{tpu_custom_call.1} parent=35 // pred_check_branch
          %444 = sbr.rel (%p442) target = $region52
        $region51: #{tpu_custom_call.1} parent=35 // pred_region
          %s445 = sand.u32 %s28, 1
          %s446 = scalar_lea.sflag [#allocation11], %s445
          %s447 = sand.u32 %s153, 1
          %s448 = smul.addr %s447, 128
          %s449 = scalar_lea.vmem [#allocation10], %s448
          %s450 = smul.u32 16, %s35
          %452 = vsyncadd %s446, 0
          %s453 = smul.addr %s450, 3
          %s454 = sadd.s32 %s36, %s453
          %s455 = smul.addr %s454, 8
          %s456 = scalar_lea.hbm %s4, %s455
          %s457 = sshll.u32 %s456, 4
          %s458 = int_to_ptr.hbm [resolvable:$true] %s457
          %s459 = sshll.u32 %s449, 4
          %s460 = int_to_ptr.vmem [resolvable:$true] %s459
          %465 = dma.hbm_to_vmem [thread:$0]  %s458, 2048, %s460, %s446, 384, 128, 8
        $region52: #{tpu_custom_call.1} parent=35 // pred_fallthru
          _
        // Predicated region
        $region53: #{tpu_custom_call.1} parent=35 // pred_check
          %p466 = pneg %p189
        $region54: #{tpu_custom_call.1} parent=35 // pred_check_branch
          %468 = sbr.rel (%p466) target = $region56
        $region55: #{tpu_custom_call.1} parent=35 // pred_region
          %s469 = smul.u32 16, %s36
          %p470 = scmp.lt.s32.totalorder %s469, 47
          %s471 = scalar_select %p470, %s469, 47
          %s472 = smul.addr %s471, 8
          %s473 = scalar_lea.vmem %s5, %s472
          %s474 = smul.u32 16, %s36
        $region56: #{tpu_custom_call.1} parent=35 // pred_fallthru
          _
        // Predicated region
        $region57: #{tpu_custom_call.1} parent=35 // pred_check
          %p475 = pneg %p217
        $region58: #{tpu_custom_call.1} parent=35 // pred_check_branch
          %477 = sbr.rel (%p475) target = $region60
        $region59: #{tpu_custom_call.1} parent=35 // pred_region
          %s478 = sand.u32 %s28, 1
          %s479 = scalar_lea.sflag [#allocation11], %s478
          %s480 = sand.u32 %s207, 1
          %s481 = smul.addr %s480, 128
          %s482 = scalar_lea.vmem [#allocation12], %s481
          %s483 = smul.u32 16, %s35
          %485 = vsyncadd %s479, 0
          %s486 = smul.addr %s483, 3
          %s487 = sadd.s32 %s36, %s486
          %s488 = smul.addr %s487, 8
          %s489 = scalar_lea.hbm %s6, %s488
          %s490 = sshll.u32 %s489, 4
          %s491 = int_to_ptr.hbm [resolvable:$true] %s490
          %s492 = sshll.u32 %s482, 4
          %s493 = int_to_ptr.vmem [resolvable:$true] %s492
          %498 = dma.hbm_to_vmem [thread:$0]  %s491, 2048, %s493, %s479, 384, 128, 8
        $region60: #{tpu_custom_call.1} parent=35 // pred_fallthru
          _
        // Predicated region
        $region61: #{tpu_custom_call.1} parent=35 // pred_check
          %p499 = pneg %p243
        $region62: #{tpu_custom_call.1} parent=35 // pred_check_branch
          %501 = sbr.rel (%p499) target = $region64
        $region63: #{tpu_custom_call.1} parent=35 // pred_region
          %s502 = smul.u32 16, %s36
          %p503 = scmp.lt.s32.totalorder %s502, 47
          %s504 = scalar_select %p503, %s502, 47
          %s505 = smul.addr %s504, 8
          %s506 = scalar_lea.vmem %s7, %s505
          %s507 = smul.u32 16, %s36
        $region64: #{tpu_custom_call.1} parent=35 // pred_fallthru
          _
      $region36: #{tpu_custom_call.1} parent=5 // pred_fallthru
        _
      %p508 = scmp.le.s32.totalorder 1, %s28
      %p509 = scmp.lt.s32.totalorder %s28, 10
      %p510 = pnand %p508, %p509
      %p511 = pneg %p510
      // Predicated region
      $region65: #{tpu_custom_call.1} parent=5 // pred_check
        _
      $region66: #{tpu_custom_call.1} parent=5 // pred_check_branch
        %513 = sbr.rel (%p510) target = $region68
      $region67: #{tpu_custom_call.1} parent=5 // pred_region
        %s514 = ssub.s32 %s28, 1
        // Predicated region
        $region69: #{tpu_custom_call.1} parent=67 // pred_check
          %p515 = pneg %p61
        $region70: #{tpu_custom_call.1} parent=67 // pred_check_branch
          %517 = sbr.rel (%p515) target = $region72
        $region71: #{tpu_custom_call.1} parent=67 // pred_region
          %519 = dma.done [#allocation8], 16
        $region72: #{tpu_custom_call.1} parent=67 // pred_fallthru
          _
        %s520 = sand.u32 %s102, 1
        %s521 = scalar_lea.sflag [#allocation6], %s520
        %s522 = sand.u32 %s102, 1
        %s523 = smul.addr %s522, 128
        %s524 = scalar_lea.vmem [#allocation9], %s523
        // Predicated region
        $region73: #{tpu_custom_call.1} parent=67 // pred_check
          %p525 = pneg %p115
        $region74: #{tpu_custom_call.1} parent=67 // pred_check_branch
          %527 = sbr.rel (%p525) target = $region76
        $region75: #{tpu_custom_call.1} parent=67 // pred_region
          %529 = dma.done %s521, 2048
        $region76: #{tpu_custom_call.1} parent=67 // pred_fallthru
          _
        %s530 = sand.u32 %s33, 1
        %s531 = scalar_lea.sflag [#allocation11], %s530
        %s532 = sand.u32 %s156, 1
        %s533 = smul.addr %s532, 128
        %s534 = scalar_lea.vmem [#allocation10], %s533
        // Predicated region
        $region77: #{tpu_custom_call.1} parent=67 // pred_check
          %p535 = pneg %p169
        $region78: #{tpu_custom_call.1} parent=67 // pred_check_branch
          %537 = sbr.rel (%p535) target = $region80
        $region79: #{tpu_custom_call.1} parent=67 // pred_region
          %539 = dma.done %s531, 2048
        $region80: #{tpu_custom_call.1} parent=67 // pred_fallthru
          _
        %s540 = sand.u32 %s33, 1
        %s541 = scalar_lea.sflag [#allocation11], %s540
        %s542 = sand.u32 %s210, 1
        %s543 = smul.addr %s542, 128
        %s544 = scalar_lea.vmem [#allocation12], %s543
        // Predicated region
        $region81: #{tpu_custom_call.1} parent=67 // pred_check
          %p545 = pneg %p223
        $region82: #{tpu_custom_call.1} parent=67 // pred_check_branch
          %547 = sbr.rel (%p545) target = $region84
        $region83: #{tpu_custom_call.1} parent=67 // pred_region
          %549 = dma.done %s541, 2048
        $region84: #{tpu_custom_call.1} parent=67 // pred_fallthru
          _
        %550 = sfence
        %p551 = pneg %p61
        %p552 = pneg %p58
        %s553 = smul.u32 16, %s37
        %p554 = scmp.lt.s32.totalorder %s553, 47
        %s555 = scalar_select %p554, %s553, 47
        %s556 = smul.addr %s555, 8
        %s557 = scalar_lea.vmem %s1, %s556
        %p558 = pneg %p87
        %p559 = pneg %p84
        %s560 = sand.u32 %s102, 1
        %s561 = scalar_lea.sflag [#allocation6], %s560
        %s562 = sand.u32 %s102, 1
        %s563 = smul.addr %s562, 128
        %s564 = scalar_lea.vmem [#allocation9], %s563
        %p565 = pneg %p115
        %p566 = pneg %p112
        %s567 = smul.u32 16, %s38
        %p568 = scmp.lt.s32.totalorder %s567, 47
        %s569 = scalar_select %p568, %s567, 47
        %s570 = smul.addr %s569, 8
        %s571 = scalar_lea.vmem %s3, %s570
        %p572 = pneg %p141
        %p573 = pneg %p138
        %s574 = sand.u32 %s33, 1
        %s575 = scalar_lea.sflag [#allocation11], %s574
        %s576 = sand.u32 %s156, 1
        %s577 = smul.addr %s576, 128
        %s578 = scalar_lea.vmem [#allocation10], %s577
        %p579 = pneg %p169
        %p580 = pneg %p166
        %s581 = smul.u32 16, %s38
        %p582 = scmp.lt.s32.totalorder %s581, 47
        %s583 = scalar_select %p582, %s581, 47
        %s584 = smul.addr %s583, 8
        %s585 = scalar_lea.vmem %s5, %s584
        %p586 = pneg %p195
        %p587 = pneg %p192
        %s588 = sand.u32 %s33, 1
        %s589 = scalar_lea.sflag [#allocation11], %s588
        %s590 = sand.u32 %s210, 1
        %s591 = smul.addr %s590, 128
        %s592 = scalar_lea.vmem [#allocation12], %s591
        %p593 = pneg %p223
        %p594 = pneg %p220
        %s595 = smul.u32 16, %s38
        %p596 = scmp.lt.s32.totalorder %s595, 47
        %s597 = scalar_select %p596, %s595, 47
        %s598 = smul.addr %s597, 8
        %s599 = scalar_lea.vmem %s7, %s598
        %p600 = pneg %p249
        %p601 = pneg %p246
        %p602 = pneg %p270
        %p603 = pneg %p267
        %p604 = pneg %p291
        %p605 = pneg %p288
        %p606 = pneg %p312
        %p607 = pneg %p309
        %p608 = pneg %p333
        %p609 = pneg %p330
        %p610 = pneg %p359
        %p611 = pneg %p356
        %s612 = sand.u32 %s346, 1
        %s613 = scalar_lea.sflag [#allocation7], %s612
        %s614 = sand.u32 %s346, 1
        %s615 = smul.addr %s614, 128
        %s616 = scalar_lea.vmem [#allocation13], %s615
        %s617 = smul.u32 16, %s37
        %p618 = scmp.lt.s32.totalorder %s617, 47
        %s619 = scalar_select %p618, %s617, 47
        %s620 = smul.addr %s619, 8
        %s621 = scalar_lea.vmem %s1, %s620
        %s622 = smul.u32 16, %s37
        %s623 = smul.u32 16, %s37
        %s624 = smul.u32 16, %s38
        %p625 = scmp.lt.s32.totalorder %s624, 47
        %s626 = scalar_select %p625, %s624, 47
        %s627 = smul.addr %s626, 8
        %s628 = scalar_lea.vmem %s3, %s627
        %s629 = smul.u32 16, %s38
        %s630 = smul.u32 16, %s37
        %s631 = smul.u32 16, %s38
        %p632 = scmp.lt.s32.totalorder %s631, 47
        %s633 = scalar_select %p632, %s631, 47
        %s634 = smul.addr %s633, 8
        %s635 = scalar_lea.vmem %s5, %s634
        %s636 = smul.u32 16, %s38
        %s637 = smul.u32 16, %s37
        %s638 = smul.u32 16, %s38
        %p639 = scmp.lt.s32.totalorder %s638, 47
        %s640 = scalar_select %p639, %s638, 47
        %s641 = smul.addr %s640, 8
        %s642 = scalar_lea.vmem %s7, %s641
        %s643 = smul.u32 16, %s38
        %s644 = smul.u32 16, %s37
        %p645 = scmp.eq.s32.totalorder %s38, 0
        // Predicated region
        $region85: #{tpu_custom_call.1} parent=67 // pred_check
          %p646 = pneg %p645
        $region86: #{tpu_custom_call.1} parent=67 // pred_check_branch
          %648 = sbr.rel (%p646) target = $region88
        $region87: #{tpu_custom_call.1} parent=67 // pred_region
          %vm649 = vcmask 64512
          %650 = vst.msk [vmem:[#allocation2] sm:$0xff] %vm649, 0.0
          %651 = vst.msk [vmem:[#allocation2 + $0x8] sm:$0xff] %vm649, 0.0
          %652 = vst.msk [vmem:[#allocation2 + $0x10] sm:$0xff] %vm649, 0.0
          %653 = vst.msk [vmem:[#allocation2 + $0x18] sm:$0xff] %vm649, 0.0
          %654 = vst.msk [vmem:[#allocation2 + $0x20] sm:$0xff] %vm649, 0.0
          %655 = vst.msk [vmem:[#allocation2 + $0x28] sm:$0xff] %vm649, 0.0
          %656 = vst.msk [vmem:[#allocation2 + $0x30] sm:$0xff] %vm649, 0.0
          %657 = vst.msk [vmem:[#allocation2 + $0x38] sm:$0xff] %vm649, 0.0
          %658 = vst.msk [vmem:[#allocation2 + $0x40] sm:$0xff] %vm649, 0.0
          %659 = vst.msk [vmem:[#allocation2 + $0x48] sm:$0xff] %vm649, 0.0
          %660 = vst.msk [vmem:[#allocation2 + $0x50] sm:$0xff] %vm649, 0.0
          %661 = vst.msk [vmem:[#allocation2 + $0x58] sm:$0xff] %vm649, 0.0
          %662 = vst.msk [vmem:[#allocation2 + $0x60] sm:$0xff] %vm649, 0.0
          %663 = vst.msk [vmem:[#allocation2 + $0x68] sm:$0xff] %vm649, 0.0
          %664 = vst.msk [vmem:[#allocation2 + $0x70] sm:$0xff] %vm649, 0.0
          %665 = vst.msk [vmem:[#allocation2 + $0x78] sm:$0xff] %vm649, 0.0
          %666 = vst.msk [vmem:[#allocation3] sm:$0xff] %vm649, 0.0
          %667 = vst.msk [vmem:[#allocation3 + $0x8] sm:$0xff] %vm649, 0.0
          %668 = vst.msk [vmem:[#allocation3 + $0x10] sm:$0xff] %vm649, 0.0
          %669 = vst.msk [vmem:[#allocation3 + $0x18] sm:$0xff] %vm649, 0.0
          %670 = vst.msk [vmem:[#allocation3 + $0x20] sm:$0xff] %vm649, 0.0
          %671 = vst.msk [vmem:[#allocation3 + $0x28] sm:$0xff] %vm649, 0.0
          %672 = vst.msk [vmem:[#allocation3 + $0x30] sm:$0xff] %vm649, 0.0
          %673 = vst.msk [vmem:[#allocation3 + $0x38] sm:$0xff] %vm649, 0.0
          %674 = vst.msk [vmem:[#allocation3 + $0x40] sm:$0xff] %vm649, 0.0
          %675 = vst.msk [vmem:[#allocation3 + $0x48] sm:$0xff] %vm649, 0.0
          %676 = vst.msk [vmem:[#allocation3 + $0x50] sm:$0xff] %vm649, 0.0
          %677 = vst.msk [vmem:[#allocation3 + $0x58] sm:$0xff] %vm649, 0.0
          %678 = vst.msk [vmem:[#allocation3 + $0x60] sm:$0xff] %vm649, 0.0
          %679 = vst.msk [vmem:[#allocation3 + $0x68] sm:$0xff] %vm649, 0.0
          %680 = vst.msk [vmem:[#allocation3 + $0x70] sm:$0xff] %vm649, 0.0
          %681 = vst.msk [vmem:[#allocation3 + $0x78] sm:$0xff] %vm649, 0.0
          %682 = vst.msk [vmem:[#allocation4] sm:$0xff] %vm649, 0.0
          %683 = vst.msk [vmem:[#allocation4 + $0x8] sm:$0xff] %vm649, 0.0
          %684 = vst.msk [vmem:[#allocation4 + $0x10] sm:$0xff] %vm649, 0.0
          %685 = vst.msk [vmem:[#allocation4 + $0x18] sm:$0xff] %vm649, 0.0
          %686 = vst.msk [vmem:[#allocation4 + $0x20] sm:$0xff] %vm649, 0.0
          %687 = vst.msk [vmem:[#allocation4 + $0x28] sm:$0xff] %vm649, 0.0
          %688 = vst.msk [vmem:[#allocation4 + $0x30] sm:$0xff] %vm649, 0.0
          %689 = vst.msk [vmem:[#allocation4 + $0x38] sm:$0xff] %vm649, 0.0
          %690 = vst.msk [vmem:[#allocation4 + $0x40] sm:$0xff] %vm649, 0.0
          %691 = vst.msk [vmem:[#allocation4 + $0x48] sm:$0xff] %vm649, 0.0
          %692 = vst.msk [vmem:[#allocation4 + $0x50] sm:$0xff] %vm649, 0.0
          %693 = vst.msk [vmem:[#allocation4 + $0x58] sm:$0xff] %vm649, 0.0
          %694 = vst.msk [vmem:[#allocation4 + $0x60] sm:$0xff] %vm649, 0.0
          %695 = vst.msk [vmem:[#allocation4 + $0x68] sm:$0xff] %vm649, 0.0
          %696 = vst.msk [vmem:[#allocation4 + $0x70] sm:$0xff] %vm649, 0.0
          %697 = vst.msk [vmem:[#allocation4 + $0x78] sm:$0xff] %vm649, 0.0
        $region88: #{tpu_custom_call.1} parent=67 // pred_fallthru
          _
        %v698 = vld [vmem:[#allocation2] sm:$0xff]
        %v699 = vld [vmem:[#allocation2 + $0x8] sm:$0xff]
        %v700 = vld [vmem:[#allocation2 + $0x10] sm:$0xff]
        %v701 = vld [vmem:[#allocation2 + $0x18] sm:$0xff]
        %v702 = vld [vmem:[#allocation2 + $0x20] sm:$0xff]
        %v703 = vld [vmem:[#allocation2 + $0x28] sm:$0xff]
        %v704 = vld [vmem:[#allocation2 + $0x30] sm:$0xff]
        %v705 = vld [vmem:[#allocation2 + $0x38] sm:$0xff]
        %v706 = vld [vmem:[#allocation2 + $0x40] sm:$0xff]
        %v707 = vld [vmem:[#allocation2 + $0x48] sm:$0xff]
        %v708 = vld [vmem:[#allocation2 + $0x50] sm:$0xff]
        %v709 = vld [vmem:[#allocation2 + $0x58] sm:$0xff]
        %v710 = vld [vmem:[#allocation2 + $0x60] sm:$0xff]
        %v711 = vld [vmem:[#allocation2 + $0x68] sm:$0xff]
        %v712 = vld [vmem:[#allocation2 + $0x70] sm:$0xff]
        %v713 = vld [vmem:[#allocation2 + $0x78] sm:$0xff]
        %v714 = vld [vmem:[%s524] sm:$0xff]
        %v715 = vld [vmem:[%s524 + $0x8] sm:$0xff]
        %v716 = vld [vmem:[%s524 + $0x10] sm:$0xff]
        %v717 = vld [vmem:[%s524 + $0x18] sm:$0xff]
        %v718 = vld [vmem:[%s524 + $0x20] sm:$0xff]
        %v719 = vld [vmem:[%s524 + $0x28] sm:$0xff]
        %v720 = vld [vmem:[%s524 + $0x30] sm:$0xff]
        %v721 = vld [vmem:[%s524 + $0x38] sm:$0xff]
        %v722 = vld [vmem:[%s524 + $0x40] sm:$0xff]
        %v723 = vld [vmem:[%s524 + $0x48] sm:$0xff]
        %v724 = vld [vmem:[%s524 + $0x50] sm:$0xff]
        %v725 = vld [vmem:[%s524 + $0x58] sm:$0xff]
        %v726 = vld [vmem:[%s524 + $0x60] sm:$0xff]
        %v727 = vld [vmem:[%s524 + $0x68] sm:$0xff]
        %v728 = vld [vmem:[%s524 + $0x70] sm:$0xff]
        %v729 = vld [vmem:[%s524 + $0x78] sm:$0xff]
        %v730 = vld [vmem:[%s628] sm:$0xff]
        %v731 = vld [vmem:[%s628 + $0x8] sm:$0xff]
        %v732 = vld [vmem:[%s628 + $0x10] sm:$0xff]
        %v733 = vld [vmem:[%s628 + $0x18] sm:$0xff]
        %v734 = vld [vmem:[%s628 + $0x20] sm:$0xff]
        %v735 = vld [vmem:[%s628 + $0x28] sm:$0xff]
        %v736 = vld [vmem:[%s628 + $0x30] sm:$0xff]
        %v737 = vld [vmem:[%s628 + $0x38] sm:$0xff]
        %v738 = vld [vmem:[%s628 + $0x40] sm:$0xff]
        %v739 = vld [vmem:[%s628 + $0x48] sm:$0xff]
        %v740 = vld [vmem:[%s628 + $0x50] sm:$0xff]
        %v741 = vld [vmem:[%s628 + $0x58] sm:$0xff]
        %v742 = vld [vmem:[%s628 + $0x60] sm:$0xff]
        %v743 = vld [vmem:[%s628 + $0x68] sm:$0xff]
        %v744 = vld [vmem:[%s628 + $0x70] sm:$0xff]
        %v745 = vld [vmem:[%s628 + $0x78] sm:$0xff]
        %746 = vmatpush.msra.mxu0 %v745
        %747 = vmatpush.msra.mxu0 %v744
        %748 = vmatpush.msra.mxu0 %v743
        %749 = vmatpush.msra.mxu0 %v742
        %750 = vmatpush.msra.mxu0 %v741
        %751 = vmatpush.msra.mxu0 %v740
        %752 = vmatpush.msra.mxu0 %v739
        %753 = vmatpush.msra.mxu0 %v738
        %754 = vmatpush.msra.mxu0 %v737
        %755 = vmatpush.msra.mxu0 %v736
        %756 = vmatpush.msra.mxu0 %v735
        %757 = vmatpush.msra.mxu0 %v734
        %758 = vmatpush.msra.mxu0 %v733
        %759 = vmatpush.msra.mxu0 %v732
        %760 = vmatpush.msra.mxu0 %v731
        %761 = vmatpush.msra.mxu0 %v730
        %762 = vmatmul.f32.gmra.mxu0 %v714
        %v763 = vpop.f32.mrf.mxu0
        %v764 = vadd.f32 0.0, %v763
        %765 = vmatmul.f32.gmra.mxu0 %v715
        %v766 = vpop.f32.mrf.mxu0
        %v767 = vadd.f32 0.0, %v766
        %768 = vmatmul.f32.gmra.mxu0 %v716
        %v769 = vpop.f32.mrf.mxu0
        %v770 = vadd.f32 0.0, %v769
        %771 = vmatmul.f32.gmra.mxu0 %v717
        %v772 = vpop.f32.mrf.mxu0
        %v773 = vadd.f32 0.0, %v772
        %774 = vmatmul.f32.gmra.mxu0 %v718
        %v775 = vpop.f32.mrf.mxu0
        %v776 = vadd.f32 0.0, %v775
        %777 = vmatmul.f32.gmra.mxu0 %v719
        %v778 = vpop.f32.mrf.mxu0
        %v779 = vadd.f32 0.0, %v778
        %780 = vmatmul.f32.gmra.mxu0 %v720
        %v781 = vpop.f32.mrf.mxu0
        %v782 = vadd.f32 0.0, %v781
        %783 = vmatmul.f32.gmra.mxu0 %v721
        %v784 = vpop.f32.mrf.mxu0
        %v785 = vadd.f32 0.0, %v784
        %786 = vmatmul.f32.gmra.mxu0 %v722
        %v787 = vpop.f32.mrf.mxu0
        %v788 = vadd.f32 0.0, %v787
        %789 = vmatmul.f32.gmra.mxu0 %v723
        %v790 = vpop.f32.mrf.mxu0
        %v791 = vadd.f32 0.0, %v790
        %792 = vmatmul.f32.gmra.mxu0 %v724
        %v793 = vpop.f32.mrf.mxu0
        %v794 = vadd.f32 0.0, %v793
        %795 = vmatmul.f32.gmra.mxu0 %v725
        %v796 = vpop.f32.mrf.mxu0
        %v797 = vadd.f32 0.0, %v796
        %798 = vmatmul.f32.gmra.mxu0 %v726
        %v799 = vpop.f32.mrf.mxu0
        %v800 = vadd.f32 0.0, %v799
        %801 = vmatmul.f32.gmra.mxu0 %v727
        %v802 = vpop.f32.mrf.mxu0
        %v803 = vadd.f32 0.0, %v802
        %804 = vmatmul.f32.gmra.mxu0 %v728
        %v805 = vpop.f32.mrf.mxu0
        %v806 = vadd.f32 0.0, %v805
        %807 = vmatmul.f32.gmra.mxu0 %v729
        %v808 = vpop.f32.mrf.mxu0
        %v809 = vadd.f32 0.0, %v808
        %810 = vdwg.mxu0
        %v811 = vadd.f32 %v698, %v764
        %v812 = vadd.f32 %v699, %v767
        %v813 = vadd.f32 %v700, %v770
        %v814 = vadd.f32 %v701, %v773
        %v815 = vadd.f32 %v702, %v776
        %v816 = vadd.f32 %v703, %v779
        %v817 = vadd.f32 %v704, %v782
        %v818 = vadd.f32 %v705, %v785
        %v819 = vadd.f32 %v706, %v788
        %v820 = vadd.f32 %v707, %v791
        %v821 = vadd.f32 %v708, %v794
        %v822 = vadd.f32 %v709, %v797
        %v823 = vadd.f32 %v710, %v800
        %v824 = vadd.f32 %v711, %v803
        %v825 = vadd.f32 %v712, %v806
        %v826 = vadd.f32 %v713, %v809
        %vm827 = vcmask 64512
        %828 = vst.msk [vmem:[#allocation2] sm:$0xff] %vm827, %v811
        %829 = vst.msk [vmem:[#allocation2 + $0x8] sm:$0xff] %vm827, %v812
        %830 = vst.msk [vmem:[#allocation2 + $0x10] sm:$0xff] %vm827, %v813
        %831 = vst.msk [vmem:[#allocation2 + $0x18] sm:$0xff] %vm827, %v814
        %832 = vst.msk [vmem:[#allocation2 + $0x20] sm:$0xff] %vm827, %v815
        %833 = vst.msk [vmem:[#allocation2 + $0x28] sm:$0xff] %vm827, %v816
        %834 = vst.msk [vmem:[#allocation2 + $0x30] sm:$0xff] %vm827, %v817
        %835 = vst.msk [vmem:[#allocation2 + $0x38] sm:$0xff] %vm827, %v818
        %836 = vst.msk [vmem:[#allocation2 + $0x40] sm:$0xff] %vm827, %v819
        %837 = vst.msk [vmem:[#allocation2 + $0x48] sm:$0xff] %vm827, %v820
        %838 = vst.msk [vmem:[#allocation2 + $0x50] sm:$0xff] %vm827, %v821
        %839 = vst.msk [vmem:[#allocation2 + $0x58] sm:$0xff] %vm827, %v822
        %840 = vst.msk [vmem:[#allocation2 + $0x60] sm:$0xff] %vm827, %v823
        %841 = vst.msk [vmem:[#allocation2 + $0x68] sm:$0xff] %vm827, %v824
        %842 = vst.msk [vmem:[#allocation2 + $0x70] sm:$0xff] %vm827, %v825
        %843 = vst.msk [vmem:[#allocation2 + $0x78] sm:$0xff] %vm827, %v826
        %v844 = vld [vmem:[#allocation3] sm:$0xff]
        %v845 = vld [vmem:[#allocation3 + $0x8] sm:$0xff]
        %v846 = vld [vmem:[#allocation3 + $0x10] sm:$0xff]
        %v847 = vld [vmem:[#allocation3 + $0x18] sm:$0xff]
        %v848 = vld [vmem:[#allocation3 + $0x20] sm:$0xff]
        %v849 = vld [vmem:[#allocation3 + $0x28] sm:$0xff]
        %v850 = vld [vmem:[#allocation3 + $0x30] sm:$0xff]
        %v851 = vld [vmem:[#allocation3 + $0x38] sm:$0xff]
        %v852 = vld [vmem:[#allocation3 + $0x40] sm:$0xff]
        %v853 = vld [vmem:[#allocation3 + $0x48] sm:$0xff]
        %v854 = vld [vmem:[#allocation3 + $0x50] sm:$0xff]
        %v855 = vld [vmem:[#allocation3 + $0x58] sm:$0xff]
        %v856 = vld [vmem:[#allocation3 + $0x60] sm:$0xff]
        %v857 = vld [vmem:[#allocation3 + $0x68] sm:$0xff]
        %v858 = vld [vmem:[#allocation3 + $0x70] sm:$0xff]
        %v859 = vld [vmem:[#allocation3 + $0x78] sm:$0xff]
        %v860 = vld [vmem:[%s534] sm:$0xff]
        %v861 = vld [vmem:[%s534 + $0x8] sm:$0xff]
        %v862 = vld [vmem:[%s534 + $0x10] sm:$0xff]
        %v863 = vld [vmem:[%s534 + $0x18] sm:$0xff]
        %v864 = vld [vmem:[%s534 + $0x20] sm:$0xff]
        %v865 = vld [vmem:[%s534 + $0x28] sm:$0xff]
        %v866 = vld [vmem:[%s534 + $0x30] sm:$0xff]
        %v867 = vld [vmem:[%s534 + $0x38] sm:$0xff]
        %v868 = vld [vmem:[%s534 + $0x40] sm:$0xff]
        %v869 = vld [vmem:[%s534 + $0x48] sm:$0xff]
        %v870 = vld [vmem:[%s534 + $0x50] sm:$0xff]
        %v871 = vld [vmem:[%s534 + $0x58] sm:$0xff]
        %v872 = vld [vmem:[%s534 + $0x60] sm:$0xff]
        %v873 = vld [vmem:[%s534 + $0x68] sm:$0xff]
        %v874 = vld [vmem:[%s534 + $0x70] sm:$0xff]
        %v875 = vld [vmem:[%s534 + $0x78] sm:$0xff]
        %v876 = vld [vmem:[%s635] sm:$0xff]
        %v877 = vld [vmem:[%s635 + $0x8] sm:$0xff]
        %v878 = vld [vmem:[%s635 + $0x10] sm:$0xff]
        %v879 = vld [vmem:[%s635 + $0x18] sm:$0xff]
        %v880 = vld [vmem:[%s635 + $0x20] sm:$0xff]
        %v881 = vld [vmem:[%s635 + $0x28] sm:$0xff]
        %v882 = vld [vmem:[%s635 + $0x30] sm:$0xff]
        %v883 = vld [vmem:[%s635 + $0x38] sm:$0xff]
        %v884 = vld [vmem:[%s635 + $0x40] sm:$0xff]
        %v885 = vld [vmem:[%s635 + $0x48] sm:$0xff]
        %v886 = vld [vmem:[%s635 + $0x50] sm:$0xff]
        %v887 = vld [vmem:[%s635 + $0x58] sm:$0xff]
        %v888 = vld [vmem:[%s635 + $0x60] sm:$0xff]
        %v889 = vld [vmem:[%s635 + $0x68] sm:$0xff]
        %v890 = vld [vmem:[%s635 + $0x70] sm:$0xff]
        %v891 = vld [vmem:[%s635 + $0x78] sm:$0xff]
        %892 = vmatpush.msra.mxu0 %v891
        %893 = vmatpush.msra.mxu0 %v890
        %894 = vmatpush.msra.mxu0 %v889
        %895 = vmatpush.msra.mxu0 %v888
        %896 = vmatpush.msra.mxu0 %v887
        %897 = vmatpush.msra.mxu0 %v886
        %898 = vmatpush.msra.mxu0 %v885
        %899 = vmatpush.msra.mxu0 %v884
        %900 = vmatpush.msra.mxu0 %v883
        %901 = vmatpush.msra.mxu0 %v882
        %902 = vmatpush.msra.mxu0 %v881
        %903 = vmatpush.msra.mxu0 %v880
        %904 = vmatpush.msra.mxu0 %v879
        %905 = vmatpush.msra.mxu0 %v878
        %906 = vmatpush.msra.mxu0 %v877
        %907 = vmatpush.msra.mxu0 %v876
        %908 = vmatmul.f32.gmra.mxu0 %v860
        %v909 = vpop.f32.mrf.mxu0
        %v910 = vadd.f32 0.0, %v909
        %911 = vmatmul.f32.gmra.mxu0 %v861
        %v912 = vpop.f32.mrf.mxu0
        %v913 = vadd.f32 0.0, %v912
        %914 = vmatmul.f32.gmra.mxu0 %v862
        %v915 = vpop.f32.mrf.mxu0
        %v916 = vadd.f32 0.0, %v915
        %917 = vmatmul.f32.gmra.mxu0 %v863
        %v918 = vpop.f32.mrf.mxu0
        %v919 = vadd.f32 0.0, %v918
        %920 = vmatmul.f32.gmra.mxu0 %v864
        %v921 = vpop.f32.mrf.mxu0
        %v922 = vadd.f32 0.0, %v921
        %923 = vmatmul.f32.gmra.mxu0 %v865
        %v924 = vpop.f32.mrf.mxu0
        %v925 = vadd.f32 0.0, %v924
        %926 = vmatmul.f32.gmra.mxu0 %v866
        %v927 = vpop.f32.mrf.mxu0
        %v928 = vadd.f32 0.0, %v927
        %929 = vmatmul.f32.gmra.mxu0 %v867
        %v930 = vpop.f32.mrf.mxu0
        %v931 = vadd.f32 0.0, %v930
        %932 = vmatmul.f32.gmra.mxu0 %v868
        %v933 = vpop.f32.mrf.mxu0
        %v934 = vadd.f32 0.0, %v933
        %935 = vmatmul.f32.gmra.mxu0 %v869
        %v936 = vpop.f32.mrf.mxu0
        %v937 = vadd.f32 0.0, %v936
        %938 = vmatmul.f32.gmra.mxu0 %v870
        %v939 = vpop.f32.mrf.mxu0
        %v940 = vadd.f32 0.0, %v939
        %941 = vmatmul.f32.gmra.mxu0 %v871
        %v942 = vpop.f32.mrf.mxu0
        %v943 = vadd.f32 0.0, %v942
        %944 = vmatmul.f32.gmra.mxu0 %v872
        %v945 = vpop.f32.mrf.mxu0
        %v946 = vadd.f32 0.0, %v945
        %947 = vmatmul.f32.gmra.mxu0 %v873
        %v948 = vpop.f32.mrf.mxu0
        %v949 = vadd.f32 0.0, %v948
        %950 = vmatmul.f32.gmra.mxu0 %v874
        %v951 = vpop.f32.mrf.mxu0
        %v952 = vadd.f32 0.0, %v951
        %953 = vmatmul.f32.gmra.mxu0 %v875
        %v954 = vpop.f32.mrf.mxu0
        %v955 = vadd.f32 0.0, %v954
        %956 = vdwg.mxu0
        %v957 = vadd.f32 %v844, %v910
        %v958 = vadd.f32 %v845, %v913
        %v959 = vadd.f32 %v846, %v916
        %v960 = vadd.f32 %v847, %v919
        %v961 = vadd.f32 %v848, %v922
        %v962 = vadd.f32 %v849, %v925
        %v963 = vadd.f32 %v850, %v928
        %v964 = vadd.f32 %v851, %v931
        %v965 = vadd.f32 %v852, %v934
        %v966 = vadd.f32 %v853, %v937
        %v967 = vadd.f32 %v854, %v940
        %v968 = vadd.f32 %v855, %v943
        %v969 = vadd.f32 %v856, %v946
        %v970 = vadd.f32 %v857, %v949
        %v971 = vadd.f32 %v858, %v952
        %v972 = vadd.f32 %v859, %v955
        %973 = vst.msk [vmem:[#allocation3] sm:$0xff] %vm827, %v957
        %974 = vst.msk [vmem:[#allocation3 + $0x8] sm:$0xff] %vm827, %v958
        %975 = vst.msk [vmem:[#allocation3 + $0x10] sm:$0xff] %vm827, %v959
        %976 = vst.msk [vmem:[#allocation3 + $0x18] sm:$0xff] %vm827, %v960
        %977 = vst.msk [vmem:[#allocation3 + $0x20] sm:$0xff] %vm827, %v961
        %978 = vst.msk [vmem:[#allocation3 + $0x28] sm:$0xff] %vm827, %v962
        %979 = vst.msk [vmem:[#allocation3 + $0x30] sm:$0xff] %vm827, %v963
        %980 = vst.msk [vmem:[#allocation3 + $0x38] sm:$0xff] %vm827, %v964
        %981 = vst.msk [vmem:[#allocation3 + $0x40] sm:$0xff] %vm827, %v965
        %982 = vst.msk [vmem:[#allocation3 + $0x48] sm:$0xff] %vm827, %v966
        %983 = vst.msk [vmem:[#allocation3 + $0x50] sm:$0xff] %vm827, %v967
        %984 = vst.msk [vmem:[#allocation3 + $0x58] sm:$0xff] %vm827, %v968
        %985 = vst.msk [vmem:[#allocation3 + $0x60] sm:$0xff] %vm827, %v969
        %986 = vst.msk [vmem:[#allocation3 + $0x68] sm:$0xff] %vm827, %v970
        %987 = vst.msk [vmem:[#allocation3 + $0x70] sm:$0xff] %vm827, %v971
        %988 = vst.msk [vmem:[#allocation3 + $0x78] sm:$0xff] %vm827, %v972
        %v989 = vld [vmem:[#allocation4] sm:$0xff]
        %v990 = vld [vmem:[#allocation4 + $0x8] sm:$0xff]
        %v991 = vld [vmem:[#allocation4 + $0x10] sm:$0xff]
        %v992 = vld [vmem:[#allocation4 + $0x18] sm:$0xff]
        %v993 = vld [vmem:[#allocation4 + $0x20] sm:$0xff]
        %v994 = vld [vmem:[#allocation4 + $0x28] sm:$0xff]
        %v995 = vld [vmem:[#allocation4 + $0x30] sm:$0xff]
        %v996 = vld [vmem:[#allocation4 + $0x38] sm:$0xff]
        %v997 = vld [vmem:[#allocation4 + $0x40] sm:$0xff]
        %v998 = vld [vmem:[#allocation4 + $0x48] sm:$0xff]
        %v999 = vld [vmem:[#allocation4 + $0x50] sm:$0xff]
        %v1000 = vld [vmem:[#allocation4 + $0x58] sm:$0xff]
        %v1001 = vld [vmem:[#allocation4 + $0x60] sm:$0xff]
        %v1002 = vld [vmem:[#allocation4 + $0x68] sm:$0xff]
        %v1003 = vld [vmem:[#allocation4 + $0x70] sm:$0xff]
        %v1004 = vld [vmem:[#allocation4 + $0x78] sm:$0xff]
        %v1005 = vld [vmem:[%s544] sm:$0xff]
        %v1006 = vld [vmem:[%s544 + $0x8] sm:$0xff]
        %v1007 = vld [vmem:[%s544 + $0x10] sm:$0xff]
        %v1008 = vld [vmem:[%s544 + $0x18] sm:$0xff]
        %v1009 = vld [vmem:[%s544 + $0x20] sm:$0xff]
        %v1010 = vld [vmem:[%s544 + $0x28] sm:$0xff]
        %v1011 = vld [vmem:[%s544 + $0x30] sm:$0xff]
        %v1012 = vld [vmem:[%s544 + $0x38] sm:$0xff]
        %v1013 = vld [vmem:[%s544 + $0x40] sm:$0xff]
        %v1014 = vld [vmem:[%s544 + $0x48] sm:$0xff]
        %v1015 = vld [vmem:[%s544 + $0x50] sm:$0xff]
        %v1016 = vld [vmem:[%s544 + $0x58] sm:$0xff]
        %v1017 = vld [vmem:[%s544 + $0x60] sm:$0xff]
        %v1018 = vld [vmem:[%s544 + $0x68] sm:$0xff]
        %v1019 = vld [vmem:[%s544 + $0x70] sm:$0xff]
        %v1020 = vld [vmem:[%s544 + $0x78] sm:$0xff]
        %v1021 = vld [vmem:[%s642] sm:$0xff]
        %v1022 = vld [vmem:[%s642 + $0x8] sm:$0xff]
        %v1023 = vld [vmem:[%s642 + $0x10] sm:$0xff]
        %v1024 = vld [vmem:[%s642 + $0x18] sm:$0xff]
        %v1025 = vld [vmem:[%s642 + $0x20] sm:$0xff]
        %v1026 = vld [vmem:[%s642 + $0x28] sm:$0xff]
        %v1027 = vld [vmem:[%s642 + $0x30] sm:$0xff]
        %v1028 = vld [vmem:[%s642 + $0x38] sm:$0xff]
        %v1029 = vld [vmem:[%s642 + $0x40] sm:$0xff]
        %v1030 = vld [vmem:[%s642 + $0x48] sm:$0xff]
        %v1031 = vld [vmem:[%s642 + $0x50] sm:$0xff]
        %v1032 = vld [vmem:[%s642 + $0x58] sm:$0xff]
        %v1033 = vld [vmem:[%s642 + $0x60] sm:$0xff]
        %v1034 = vld [vmem:[%s642 + $0x68] sm:$0xff]
        %v1035 = vld [vmem:[%s642 + $0x70] sm:$0xff]
        %v1036 = vld [vmem:[%s642 + $0x78] sm:$0xff]
        %1037 = vmatpush.msra.mxu0 %v1036
        %1038 = vmatpush.msra.mxu0 %v1035
        %1039 = vmatpush.msra.mxu0 %v1034
        %1040 = vmatpush.msra.mxu0 %v1033
        %1041 = vmatpush.msra.mxu0 %v1032
        %1042 = vmatpush.msra.mxu0 %v1031
        %1043 = vmatpush.msra.mxu0 %v1030
        %1044 = vmatpush.msra.mxu0 %v1029
        %1045 = vmatpush.msra.mxu0 %v1028
        %1046 = vmatpush.msra.mxu0 %v1027
        %1047 = vmatpush.msra.mxu0 %v1026
        %1048 = vmatpush.msra.mxu0 %v1025
        %1049 = vmatpush.msra.mxu0 %v1024
        %1050 = vmatpush.msra.mxu0 %v1023
        %1051 = vmatpush.msra.mxu0 %v1022
        %1052 = vmatpush.msra.mxu0 %v1021
        %1053 = vmatmul.f32.gmra.mxu0 %v1005
        %v1054 = vpop.f32.mrf.mxu0
        %v1055 = vadd.f32 0.0, %v1054
        %1056 = vmatmul.f32.gmra.mxu0 %v1006
        %v1057 = vpop.f32.mrf.mxu0
        %v1058 = vadd.f32 0.0, %v1057
        %1059 = vmatmul.f32.gmra.mxu0 %v1007
        %v1060 = vpop.f32.mrf.mxu0
        %v1061 = vadd.f32 0.0, %v1060
        %1062 = vmatmul.f32.gmra.mxu0 %v1008
        %v1063 = vpop.f32.mrf.mxu0
        %v1064 = vadd.f32 0.0, %v1063
        %1065 = vmatmul.f32.gmra.mxu0 %v1009
        %v1066 = vpop.f32.mrf.mxu0
        %v1067 = vadd.f32 0.0, %v1066
        %1068 = vmatmul.f32.gmra.mxu0 %v1010
        %v1069 = vpop.f32.mrf.mxu0
        %v1070 = vadd.f32 0.0, %v1069
        %1071 = vmatmul.f32.gmra.mxu0 %v1011
        %v1072 = vpop.f32.mrf.mxu0
        %v1073 = vadd.f32 0.0, %v1072
        %1074 = vmatmul.f32.gmra.mxu0 %v1012
        %v1075 = vpop.f32.mrf.mxu0
        %v1076 = vadd.f32 0.0, %v1075
        %1077 = vmatmul.f32.gmra.mxu0 %v1013
        %v1078 = vpop.f32.mrf.mxu0
        %v1079 = vadd.f32 0.0, %v1078
        %1080 = vmatmul.f32.gmra.mxu0 %v1014
        %v1081 = vpop.f32.mrf.mxu0
        %v1082 = vadd.f32 0.0, %v1081
        %1083 = vmatmul.f32.gmra.mxu0 %v1015
        %v1084 = vpop.f32.mrf.mxu0
        %v1085 = vadd.f32 0.0, %v1084
        %1086 = vmatmul.f32.gmra.mxu0 %v1016
        %v1087 = vpop.f32.mrf.mxu0
        %v1088 = vadd.f32 0.0, %v1087
        %1089 = vmatmul.f32.gmra.mxu0 %v1017
        %v1090 = vpop.f32.mrf.mxu0
        %v1091 = vadd.f32 0.0, %v1090
        %1092 = vmatmul.f32.gmra.mxu0 %v1018
        %v1093 = vpop.f32.mrf.mxu0
        %v1094 = vadd.f32 0.0, %v1093
        %1095 = vmatmul.f32.gmra.mxu0 %v1019
        %v1096 = vpop.f32.mrf.mxu0
        %v1097 = vadd.f32 0.0, %v1096
        %1098 = vmatmul.f32.gmra.mxu0 %v1020
        %v1099 = vpop.f32.mrf.mxu0
        %v1100 = vadd.f32 0.0, %v1099
        %1101 = vdwg.mxu0
        %v1102 = vadd.f32 %v989, %v1055
        %v1103 = vadd.f32 %v990, %v1058
        %v1104 = vadd.f32 %v991, %v1061
        %v1105 = vadd.f32 %v992, %v1064
        %v1106 = vadd.f32 %v993, %v1067
        %v1107 = vadd.f32 %v994, %v1070
        %v1108 = vadd.f32 %v995, %v1073
        %v1109 = vadd.f32 %v996, %v1076
        %v1110 = vadd.f32 %v997, %v1079
        %v1111 = vadd.f32 %v998, %v1082
        %v1112 = vadd.f32 %v999, %v1085
        %v1113 = vadd.f32 %v1000, %v1088
        %v1114 = vadd.f32 %v1001, %v1091
        %v1115 = vadd.f32 %v1002, %v1094
        %v1116 = vadd.f32 %v1003, %v1097
        %v1117 = vadd.f32 %v1004, %v1100
        %1118 = vst.msk [vmem:[#allocation4] sm:$0xff] %vm827, %v1102
        %1119 = vst.msk [vmem:[#allocation4 + $0x8] sm:$0xff] %vm827, %v1103
        %1120 = vst.msk [vmem:[#allocation4 + $0x10] sm:$0xff] %vm827, %v1104
        %1121 = vst.msk [vmem:[#allocation4 + $0x18] sm:$0xff] %vm827, %v1105
        %1122 = vst.msk [vmem:[#allocation4 + $0x20] sm:$0xff] %vm827, %v1106
        %1123 = vst.msk [vmem:[#allocation4 + $0x28] sm:$0xff] %vm827, %v1107
        %1124 = vst.msk [vmem:[#allocation4 + $0x30] sm:$0xff] %vm827, %v1108
        %1125 = vst.msk [vmem:[#allocation4 + $0x38] sm:$0xff] %vm827, %v1109
        %1126 = vst.msk [vmem:[#allocation4 + $0x40] sm:$0xff] %vm827, %v1110
        %1127 = vst.msk [vmem:[#allocation4 + $0x48] sm:$0xff] %vm827, %v1111
        %1128 = vst.msk [vmem:[#allocation4 + $0x50] sm:$0xff] %vm827, %v1112
        %1129 = vst.msk [vmem:[#allocation4 + $0x58] sm:$0xff] %vm827, %v1113
        %1130 = vst.msk [vmem:[#allocation4 + $0x60] sm:$0xff] %vm827, %v1114
        %1131 = vst.msk [vmem:[#allocation4 + $0x68] sm:$0xff] %vm827, %v1115
        %1132 = vst.msk [vmem:[#allocation4 + $0x70] sm:$0xff] %vm827, %v1116
        %1133 = vst.msk [vmem:[#allocation4 + $0x78] sm:$0xff] %vm827, %v1117
        %p1134 = scmp.eq.s32.totalorder %s38, 2
        // Predicated region
        $region89: #{tpu_custom_call.1} parent=67 // pred_check
          %p1135 = pneg %p1134
        $region90: #{tpu_custom_call.1} parent=67 // pred_check_branch
          %1137 = sbr.rel (%p1135) target = $region92
        $region91: #{tpu_custom_call.1} parent=67 // pred_region
          %s1138 = sld [smem:[#allocation5]]
          %s1139 = smul.f32 %s1138, 1.01
          %s1140 = sld [smem:[#allocation5 + $0x1]]
          %s1141 = smul.f32 %s1140, 1.01
          %s1142 = sld [smem:[#allocation5 + $0x2]]
          %s1143 = smul.f32 %s1142, 1.01
          %v1144 = vld [vmem:[%s621] sm:$0xff]
          %v1145 = vld [vmem:[%s621 + $0x8] sm:$0xff]
          %v1146 = vld [vmem:[%s621 + $0x10] sm:$0xff]
          %v1147 = vld [vmem:[%s621 + $0x18] sm:$0xff]
          %v1148 = vld [vmem:[%s621 + $0x20] sm:$0xff]
          %v1149 = vld [vmem:[%s621 + $0x28] sm:$0xff]
          %v1150 = vld [vmem:[%s621 + $0x30] sm:$0xff]
          %v1151 = vld [vmem:[%s621 + $0x38] sm:$0xff]
          %v1152 = vld [vmem:[%s621 + $0x40] sm:$0xff]
          %v1153 = vld [vmem:[%s621 + $0x48] sm:$0xff]
          %v1154 = vld [vmem:[%s621 + $0x50] sm:$0xff]
          %v1155 = vld [vmem:[%s621 + $0x58] sm:$0xff]
          %v1156 = vld [vmem:[%s621 + $0x60] sm:$0xff]
          %v1157 = vld [vmem:[%s621 + $0x68] sm:$0xff]
          %v1158 = vld [vmem:[%s621 + $0x70] sm:$0xff]
          %v1159 = vld [vmem:[%s621 + $0x78] sm:$0xff]
          %v1160 = vld [vmem:[%s8] sm:$0xff]
          %v1161 = vld [vmem:[#allocation2] sm:$0xff]
          %v1162 = vld [vmem:[#allocation2 + $0x8] sm:$0xff]
          %v1163 = vld [vmem:[#allocation2 + $0x10] sm:$0xff]
          %v1164 = vld [vmem:[#allocation2 + $0x18] sm:$0xff]
          %v1165 = vld [vmem:[#allocation2 + $0x20] sm:$0xff]
          %v1166 = vld [vmem:[#allocation2 + $0x28] sm:$0xff]
          %v1167 = vld [vmem:[#allocation2 + $0x30] sm:$0xff]
          %v1168 = vld [vmem:[#allocation2 + $0x38] sm:$0xff]
          %v1169 = vld [vmem:[#allocation2 + $0x40] sm:$0xff]
          %v1170 = vld [vmem:[#allocation2 + $0x48] sm:$0xff]
          %v1171 = vld [vmem:[#allocation2 + $0x50] sm:$0xff]
          %v1172 = vld [vmem:[#allocation2 + $0x58] sm:$0xff]
          %v1173 = vld [vmem:[#allocation2 + $0x60] sm:$0xff]
          %v1174 = vld [vmem:[#allocation2 + $0x68] sm:$0xff]
          %v1175 = vld [vmem:[#allocation2 + $0x70] sm:$0xff]
          %v1176 = vld [vmem:[#allocation2 + $0x78] sm:$0xff]
          %v1177 = vstv %s1139
          %v1178 = vmul.f32 %v1177, %v1161
          %v1179 = vmul.f32 %v1177, %v1162
          %v1180 = vmul.f32 %v1177, %v1163
          %v1181 = vmul.f32 %v1177, %v1164
          %v1182 = vmul.f32 %v1177, %v1165
          %v1183 = vmul.f32 %v1177, %v1166
          %v1184 = vmul.f32 %v1177, %v1167
          %v1185 = vmul.f32 %v1177, %v1168
          %v1186 = vmul.f32 %v1177, %v1169
          %v1187 = vmul.f32 %v1177, %v1170
          %v1188 = vmul.f32 %v1177, %v1171
          %v1189 = vmul.f32 %v1177, %v1172
          %v1190 = vmul.f32 %v1177, %v1173
          %v1191 = vmul.f32 %v1177, %v1174
          %v1192 = vmul.f32 %v1177, %v1175
          %v1193 = vmul.f32 %v1177, %v1176
          %v1195 = vsel %vm827, %v1178, 0
          %v1198 = vsel %vm827, %v1179, 0
          %v1201 = vsel %vm827, %v1180, 0
          %v1204 = vsel %vm827, %v1181, 0
          %v1207 = vsel %vm827, %v1182, 0
          %v1210 = vsel %vm827, %v1183, 0
          %v1213 = vsel %vm827, %v1184, 0
          %v1216 = vsel %vm827, %v1185, 0
          %v1219 = vsel %vm827, %v1186, 0
          %v1222 = vsel %vm827, %v1187, 0
          %v1225 = vsel %vm827, %v1188, 0
          %v1228 = vsel %vm827, %v1189, 0
          %v1231 = vsel %vm827, %v1190, 0
          %v1234 = vsel %vm827, %v1191, 0
          %v1237 = vsel %vm827, %v1192, 0
          %v1240 = vsel %vm827, %v1193, 0
          %1242 = vmatpush.msra.mxu0 0.0
          %1243 = vmatpush.msra.mxu0 0.0
          %1244 = vmatpush.msra.mxu0 0.0
          %1245 = vmatpush.msra.mxu0 0.0
          %1246 = vmatpush.msra.mxu0 0.0
          %1247 = vmatpush.msra.mxu0 0.0
          %1248 = vmatpush.msra.mxu0 0.0
          %1249 = vmatpush.msra.mxu0 0.0
          %1250 = vmatpush.msra.mxu0 0.0
          %1251 = vmatpush.msra.mxu0 0.0
          %1252 = vmatpush.msra.mxu0 0.0
          %1253 = vmatpush.msra.mxu0 0.0
          %1254 = vmatpush.msra.mxu0 0.0
          %1255 = vmatpush.msra.mxu0 0.0
          %1256 = vmatpush.msra.mxu0 0.0
          %1257 = vmatpush.msra.mxu0 %v1160
          %1258 = vmatmul.f32.gmra.mxu0 %v1195
          %v1259 = vpop.f32.mrf.mxu0
          %v1260 = vadd.f32 0.0, %v1259
          %1261 = vmatmul.f32.gmra.mxu0 %v1198
          %v1262 = vpop.f32.mrf.mxu0
          %v1263 = vadd.f32 0.0, %v1262
          %1264 = vmatmul.f32.gmra.mxu0 %v1201
          %v1265 = vpop.f32.mrf.mxu0
          %v1266 = vadd.f32 0.0, %v1265
          %1267 = vmatmul.f32.gmra.mxu0 %v1204
          %v1268 = vpop.f32.mrf.mxu0
          %v1269 = vadd.f32 0.0, %v1268
          %1270 = vmatmul.f32.gmra.mxu0 %v1207
          %v1271 = vpop.f32.mrf.mxu0
          %v1272 = vadd.f32 0.0, %v1271
          %1273 = vmatmul.f32.gmra.mxu0 %v1210
          %v1274 = vpop.f32.mrf.mxu0
          %v1275 = vadd.f32 0.0, %v1274
          %1276 = vmatmul.f32.gmra.mxu0 %v1213
          %v1277 = vpop.f32.mrf.mxu0
          %v1278 = vadd.f32 0.0, %v1277
          %1279 = vmatmul.f32.gmra.mxu0 %v1216
          %v1280 = vpop.f32.mrf.mxu0
          %v1281 = vadd.f32 0.0, %v1280
          %1282 = vmatmul.f32.gmra.mxu0 %v1219
          %v1283 = vpop.f32.mrf.mxu0
          %v1284 = vadd.f32 0.0, %v1283
          %1285 = vmatmul.f32.gmra.mxu0 %v1222
          %v1286 = vpop.f32.mrf.mxu0
          %v1287 = vadd.f32 0.0, %v1286
          %1288 = vmatmul.f32.gmra.mxu0 %v1225
          %v1289 = vpop.f32.mrf.mxu0
          %v1290 = vadd.f32 0.0, %v1289
          %1291 = vmatmul.f32.gmra.mxu0 %v1228
          %v1292 = vpop.f32.mrf.mxu0
          %v1293 = vadd.f32 0.0, %v1292
          %1294 = vmatmul.f32.gmra.mxu0 %v1231
          %v1295 = vpop.f32.mrf.mxu0
          %v1296 = vadd.f32 0.0, %v1295
          %1297 = vmatmul.f32.gmra.mxu0 %v1234
          %v1298 = vpop.f32.mrf.mxu0
          %v1299 = vadd.f32 0.0, %v1298
          %1300 = vmatmul.f32.gmra.mxu0 %v1237
          %v1301 = vpop.f32.mrf.mxu0
          %v1302 = vadd.f32 0.0, %v1301
          %1303 = vmatmul.f32.gmra.mxu0 %v1240
          %v1304 = vpop.f32.mrf.mxu0
          %v1305 = vadd.f32 0.0, %v1304
          %1306 = vdwg.mxu0
          %v1307 = vld [vmem:[#allocation3] sm:$0xff]
          %v1308 = vld [vmem:[#allocation3 + $0x8] sm:$0xff]
          %v1309 = vld [vmem:[#allocation3 + $0x10] sm:$0xff]
          %v1310 = vld [vmem:[#allocation3 + $0x18] sm:$0xff]
          %v1311 = vld [vmem:[#allocation3 + $0x20] sm:$0xff]
          %v1312 = vld [vmem:[#allocation3 + $0x28] sm:$0xff]
          %v1313 = vld [vmem:[#allocation3 + $0x30] sm:$0xff]
          %v1314 = vld [vmem:[#allocation3 + $0x38] sm:$0xff]
          %v1315 = vld [vmem:[#allocation3 + $0x40] sm:$0xff]
          %v1316 = vld [vmem:[#allocation3 + $0x48] sm:$0xff]
          %v1317 = vld [vmem:[#allocation3 + $0x50] sm:$0xff]
          %v1318 = vld [vmem:[#allocation3 + $0x58] sm:$0xff]
          %v1319 = vld [vmem:[#allocation3 + $0x60] sm:$0xff]
          %v1320 = vld [vmem:[#allocation3 + $0x68] sm:$0xff]
          %v1321 = vld [vmem:[#allocation3 + $0x70] sm:$0xff]
          %v1322 = vld [vmem:[#allocation3 + $0x78] sm:$0xff]
          %v1323 = vstv %s1141
          %v1324 = vmul.f32 %v1323, %v1307
          %v1325 = vmul.f32 %v1323, %v1308
          %v1326 = vmul.f32 %v1323, %v1309
          %v1327 = vmul.f32 %v1323, %v1310
          %v1328 = vmul.f32 %v1323, %v1311
          %v1329 = vmul.f32 %v1323, %v1312
          %v1330 = vmul.f32 %v1323, %v1313
          %v1331 = vmul.f32 %v1323, %v1314
          %v1332 = vmul.f32 %v1323, %v1315
          %v1333 = vmul.f32 %v1323, %v1316
          %v1334 = vmul.f32 %v1323, %v1317
          %v1335 = vmul.f32 %v1323, %v1318
          %v1336 = vmul.f32 %v1323, %v1319
          %v1337 = vmul.f32 %v1323, %v1320
          %v1338 = vmul.f32 %v1323, %v1321
          %v1339 = vmul.f32 %v1323, %v1322
          %v1340 = vld [vmem:[%s9] sm:$0xff]
          %v1342 = vsel %vm827, %v1324, 0
          %v1345 = vsel %vm827, %v1325, 0
          %v1348 = vsel %vm827, %v1326, 0
          %v1351 = vsel %vm827, %v1327, 0
          %v1354 = vsel %vm827, %v1328, 0
          %v1357 = vsel %vm827, %v1329, 0
          %v1360 = vsel %vm827, %v1330, 0
          %v1363 = vsel %vm827, %v1331, 0
          %v1366 = vsel %vm827, %v1332, 0
          %v1369 = vsel %vm827, %v1333, 0
          %v1372 = vsel %vm827, %v1334, 0
          %v1375 = vsel %vm827, %v1335, 0
          %v1378 = vsel %vm827, %v1336, 0
          %v1381 = vsel %vm827, %v1337, 0
          %v1384 = vsel %vm827, %v1338, 0
          %v1387 = vsel %vm827, %v1339, 0
          %1389 = vmatpush.msra.mxu0 0.0
          %1390 = vmatpush.msra.mxu0 0.0
          %1391 = vmatpush.msra.mxu0 0.0
          %1392 = vmatpush.msra.mxu0 0.0
          %1393 = vmatpush.msra.mxu0 0.0
          %1394 = vmatpush.msra.mxu0 0.0
          %1395 = vmatpush.msra.mxu0 0.0
          %1396 = vmatpush.msra.mxu0 0.0
          %1397 = vmatpush.msra.mxu0 0.0
          %1398 = vmatpush.msra.mxu0 0.0
          %1399 = vmatpush.msra.mxu0 0.0
          %1400 = vmatpush.msra.mxu0 0.0
          %1401 = vmatpush.msra.mxu0 0.0
          %1402 = vmatpush.msra.mxu0 0.0
          %1403 = vmatpush.msra.mxu0 0.0
          %1404 = vmatpush.msra.mxu0 %v1340
          %1405 = vmatmul.f32.gmra.mxu0 %v1342
          %v1406 = vpop.f32.mrf.mxu0
          %v1407 = vadd.f32 0.0, %v1406
          %1408 = vmatmul.f32.gmra.mxu0 %v1345
          %v1409 = vpop.f32.mrf.mxu0
          %v1410 = vadd.f32 0.0, %v1409
          %1411 = vmatmul.f32.gmra.mxu0 %v1348
          %v1412 = vpop.f32.mrf.mxu0
          %v1413 = vadd.f32 0.0, %v1412
          %1414 = vmatmul.f32.gmra.mxu0 %v1351
          %v1415 = vpop.f32.mrf.mxu0
          %v1416 = vadd.f32 0.0, %v1415
          %1417 = vmatmul.f32.gmra.mxu0 %v1354
          %v1418 = vpop.f32.mrf.mxu0
          %v1419 = vadd.f32 0.0, %v1418
          %1420 = vmatmul.f32.gmra.mxu0 %v1357
          %v1421 = vpop.f32.mrf.mxu0
          %v1422 = vadd.f32 0.0, %v1421
          %1423 = vmatmul.f32.gmra.mxu0 %v1360
          %v1424 = vpop.f32.mrf.mxu0
          %v1425 = vadd.f32 0.0, %v1424
          %1426 = vmatmul.f32.gmra.mxu0 %v1363
          %v1427 = vpop.f32.mrf.mxu0
          %v1428 = vadd.f32 0.0, %v1427
          %1429 = vmatmul.f32.gmra.mxu0 %v1366
          %v1430 = vpop.f32.mrf.mxu0
          %v1431 = vadd.f32 0.0, %v1430
          %1432 = vmatmul.f32.gmra.mxu0 %v1369
          %v1433 = vpop.f32.mrf.mxu0
          %v1434 = vadd.f32 0.0, %v1433
          %1435 = vmatmul.f32.gmra.mxu0 %v1372
          %v1436 = vpop.f32.mrf.mxu0
          %v1437 = vadd.f32 0.0, %v1436
          %1438 = vmatmul.f32.gmra.mxu0 %v1375
          %v1439 = vpop.f32.mrf.mxu0
          %v1440 = vadd.f32 0.0, %v1439
          %1441 = vmatmul.f32.gmra.mxu0 %v1378
          %v1442 = vpop.f32.mrf.mxu0
          %v1443 = vadd.f32 0.0, %v1442
          %1444 = vmatmul.f32.gmra.mxu0 %v1381
          %v1445 = vpop.f32.mrf.mxu0
          %v1446 = vadd.f32 0.0, %v1445
          %1447 = vmatmul.f32.gmra.mxu0 %v1384
          %v1448 = vpop.f32.mrf.mxu0
          %v1449 = vadd.f32 0.0, %v1448
          %1450 = vmatmul.f32.gmra.mxu0 %v1387
          %v1451 = vpop.f32.mrf.mxu0
          %v1452 = vadd.f32 0.0, %v1451
          %1453 = vdwg.mxu0
          %v1454 = vld [vmem:[#allocation4] sm:$0xff]
          %v1455 = vld [vmem:[#allocation4 + $0x8] sm:$0xff]
          %v1456 = vld [vmem:[#allocation4 + $0x10] sm:$0xff]
          %v1457 = vld [vmem:[#allocation4 + $0x18] sm:$0xff]
          %v1458 = vld [vmem:[#allocation4 + $0x20] sm:$0xff]
          %v1459 = vld [vmem:[#allocation4 + $0x28] sm:$0xff]
          %v1460 = vld [vmem:[#allocation4 + $0x30] sm:$0xff]
          %v1461 = vld [vmem:[#allocation4 + $0x38] sm:$0xff]
          %v1462 = vld [vmem:[#allocation4 + $0x40] sm:$0xff]
          %v1463 = vld [vmem:[#allocation4 + $0x48] sm:$0xff]
          %v1464 = vld [vmem:[#allocation4 + $0x50] sm:$0xff]
          %v1465 = vld [vmem:[#allocation4 + $0x58] sm:$0xff]
          %v1466 = vld [vmem:[#allocation4 + $0x60] sm:$0xff]
          %v1467 = vld [vmem:[#allocation4 + $0x68] sm:$0xff]
          %v1468 = vld [vmem:[#allocation4 + $0x70] sm:$0xff]
          %v1469 = vld [vmem:[#allocation4 + $0x78] sm:$0xff]
          %v1470 = vstv %s1143
          %v1471 = vmul.f32 %v1470, %v1454
          %v1472 = vmul.f32 %v1470, %v1455
          %v1473 = vmul.f32 %v1470, %v1456
          %v1474 = vmul.f32 %v1470, %v1457
          %v1475 = vmul.f32 %v1470, %v1458
          %v1476 = vmul.f32 %v1470, %v1459
          %v1477 = vmul.f32 %v1470, %v1460
          %v1478 = vmul.f32 %v1470, %v1461
          %v1479 = vmul.f32 %v1470, %v1462
          %v1480 = vmul.f32 %v1470, %v1463
          %v1481 = vmul.f32 %v1470, %v1464
          %v1482 = vmul.f32 %v1470, %v1465
          %v1483 = vmul.f32 %v1470, %v1466
          %v1484 = vmul.f32 %v1470, %v1467
          %v1485 = vmul.f32 %v1470, %v1468
          %v1486 = vmul.f32 %v1470, %v1469
          %v1487 = vld [vmem:[%s10] sm:$0xff]
          %v1489 = vsel %vm827, %v1471, 0
          %v1492 = vsel %vm827, %v1472, 0
          %v1495 = vsel %vm827, %v1473, 0
          %v1498 = vsel %vm827, %v1474, 0
          %v1501 = vsel %vm827, %v1475, 0
          %v1504 = vsel %vm827, %v1476, 0
          %v1507 = vsel %vm827, %v1477, 0
          %v1510 = vsel %vm827, %v1478, 0
          %v1513 = vsel %vm827, %v1479, 0
          %v1516 = vsel %vm827, %v1480, 0
          %v1519 = vsel %vm827, %v1481, 0
          %v1522 = vsel %vm827, %v1482, 0
          %v1525 = vsel %vm827, %v1483, 0
          %v1528 = vsel %vm827, %v1484, 0
          %v1531 = vsel %vm827, %v1485, 0
          %v1534 = vsel %vm827, %v1486, 0
          %1536 = vmatpush.msra.mxu0 0.0
          %1537 = vmatpush.msra.mxu0 0.0
          %1538 = vmatpush.msra.mxu0 0.0
          %1539 = vmatpush.msra.mxu0 0.0
          %1540 = vmatpush.msra.mxu0 0.0
          %1541 = vmatpush.msra.mxu0 0.0
          %1542 = vmatpush.msra.mxu0 0.0
          %1543 = vmatpush.msra.mxu0 0.0
          %1544 = vmatpush.msra.mxu0 0.0
          %1545 = vmatpush.msra.mxu0 0.0
          %1546 = vmatpush.msra.mxu0 0.0
          %1547 = vmatpush.msra.mxu0 0.0
          %1548 = vmatpush.msra.mxu0 0.0
          %1549 = vmatpush.msra.mxu0 0.0
          %1550 = vmatpush.msra.mxu0 0.0
          %1551 = vmatpush.msra.mxu0 %v1487
          %1552 = vmatmul.f32.gmra.mxu0 %v1489
          %v1553 = vpop.f32.mrf.mxu0
          %v1554 = vadd.f32 0.0, %v1553
          %1555 = vmatmul.f32.gmra.mxu0 %v1492
          %v1556 = vpop.f32.mrf.mxu0
          %v1557 = vadd.f32 0.0, %v1556
          %1558 = vmatmul.f32.gmra.mxu0 %v1495
          %v1559 = vpop.f32.mrf.mxu0
          %v1560 = vadd.f32 0.0, %v1559
          %1561 = vmatmul.f32.gmra.mxu0 %v1498
          %v1562 = vpop.f32.mrf.mxu0
          %v1563 = vadd.f32 0.0, %v1562
          %1564 = vmatmul.f32.gmra.mxu0 %v1501
          %v1565 = vpop.f32.mrf.mxu0
          %v1566 = vadd.f32 0.0, %v1565
          %1567 = vmatmul.f32.gmra.mxu0 %v1504
          %v1568 = vpop.f32.mrf.mxu0
          %v1569 = vadd.f32 0.0, %v1568
          %1570 = vmatmul.f32.gmra.mxu0 %v1507
          %v1571 = vpop.f32.mrf.mxu0
          %v1572 = vadd.f32 0.0, %v1571
          %1573 = vmatmul.f32.gmra.mxu0 %v1510
          %v1574 = vpop.f32.mrf.mxu0
          %v1575 = vadd.f32 0.0, %v1574
          %1576 = vmatmul.f32.gmra.mxu0 %v1513
          %v1577 = vpop.f32.mrf.mxu0
          %v1578 = vadd.f32 0.0, %v1577
          %1579 = vmatmul.f32.gmra.mxu0 %v1516
          %v1580 = vpop.f32.mrf.mxu0
          %v1581 = vadd.f32 0.0, %v1580
          %1582 = vmatmul.f32.gmra.mxu0 %v1519
          %v1583 = vpop.f32.mrf.mxu0
          %v1584 = vadd.f32 0.0, %v1583
          %1585 = vmatmul.f32.gmra.mxu0 %v1522
          %v1586 = vpop.f32.mrf.mxu0
          %v1587 = vadd.f32 0.0, %v1586
          %1588 = vmatmul.f32.gmra.mxu0 %v1525
          %v1589 = vpop.f32.mrf.mxu0
          %v1590 = vadd.f32 0.0, %v1589
          %1591 = vmatmul.f32.gmra.mxu0 %v1528
          %v1592 = vpop.f32.mrf.mxu0
          %v1593 = vadd.f32 0.0, %v1592
          %1594 = vmatmul.f32.gmra.mxu0 %v1531
          %v1595 = vpop.f32.mrf.mxu0
          %v1596 = vadd.f32 0.0, %v1595
          %1597 = vmatmul.f32.gmra.mxu0 %v1534
          %v1598 = vpop.f32.mrf.mxu0
          %v1599 = vadd.f32 0.0, %v1598
          %1600 = vdwg.mxu0
          %v1602 = vsel %vm827, %v1144, 0
          %v1605 = vsel %vm827, %v1145, 0
          %v1608 = vsel %vm827, %v1146, 0
          %v1611 = vsel %vm827, %v1147, 0
          %v1614 = vsel %vm827, %v1148, 0
          %v1617 = vsel %vm827, %v1149, 0
          %v1620 = vsel %vm827, %v1150, 0
          %v1623 = vsel %vm827, %v1151, 0
          %v1626 = vsel %vm827, %v1152, 0
          %v1629 = vsel %vm827, %v1153, 0
          %v1632 = vsel %vm827, %v1154, 0
          %v1635 = vsel %vm827, %v1155, 0
          %v1638 = vsel %vm827, %v1156, 0
          %v1641 = vsel %vm827, %v1157, 0
          %v1644 = vsel %vm827, %v1158, 0
          %v1647 = vsel %vm827, %v1159, 0
          %1649 = vmatpush.msra.mxu0 0.0
          %1650 = vmatpush.msra.mxu0 0.0
          %1651 = vmatpush.msra.mxu0 0.0
          %1652 = vmatpush.msra.mxu0 0.0
          %1653 = vmatpush.msra.mxu0 0.0
          %1654 = vmatpush.msra.mxu0 0.0
          %1655 = vmatpush.msra.mxu0 0.0
          %1656 = vmatpush.msra.mxu0 0.0
          %1657 = vmatpush.msra.mxu0 0.0
          %1658 = vmatpush.msra.mxu0 0.0
          %1659 = vmatpush.msra.mxu0 0.0
          %1660 = vmatpush.msra.mxu0 0.0
          %1661 = vmatpush.msra.mxu0 0.0
          %1662 = vmatpush.msra.mxu0 0.0
          %1663 = vmatpush.msra.mxu0 0.0
          %1664 = vmatpush.msra.mxu0 %v1160
          %1665 = vmatmul.f32.gmra.mxu0 %v1602
          %v1666 = vpop.f32.mrf.mxu0
          %v1667 = vadd.f32 %v1260, %v1666
          %1668 = vmatmul.f32.gmra.mxu0 %v1605
          %v1669 = vpop.f32.mrf.mxu0
          %v1670 = vadd.f32 %v1263, %v1669
          %1671 = vmatmul.f32.gmra.mxu0 %v1608
          %v1672 = vpop.f32.mrf.mxu0
          %v1673 = vadd.f32 %v1266, %v1672
          %1674 = vmatmul.f32.gmra.mxu0 %v1611
          %v1675 = vpop.f32.mrf.mxu0
          %v1676 = vadd.f32 %v1269, %v1675
          %1677 = vmatmul.f32.gmra.mxu0 %v1614
          %v1678 = vpop.f32.mrf.mxu0
          %v1679 = vadd.f32 %v1272, %v1678
          %1680 = vmatmul.f32.gmra.mxu0 %v1617
          %v1681 = vpop.f32.mrf.mxu0
          %v1682 = vadd.f32 %v1275, %v1681
          %1683 = vmatmul.f32.gmra.mxu0 %v1620
          %v1684 = vpop.f32.mrf.mxu0
          %v1685 = vadd.f32 %v1278, %v1684
          %1686 = vmatmul.f32.gmra.mxu0 %v1623
          %v1687 = vpop.f32.mrf.mxu0
          %v1688 = vadd.f32 %v1281, %v1687
          %1689 = vmatmul.f32.gmra.mxu0 %v1626
          %v1690 = vpop.f32.mrf.mxu0
          %v1691 = vadd.f32 %v1284, %v1690
          %1692 = vmatmul.f32.gmra.mxu0 %v1629
          %v1693 = vpop.f32.mrf.mxu0
          %v1694 = vadd.f32 %v1287, %v1693
          %1695 = vmatmul.f32.gmra.mxu0 %v1632
          %v1696 = vpop.f32.mrf.mxu0
          %v1697 = vadd.f32 %v1290, %v1696
          %1698 = vmatmul.f32.gmra.mxu0 %v1635
          %v1699 = vpop.f32.mrf.mxu0
          %v1700 = vadd.f32 %v1293, %v1699
          %1701 = vmatmul.f32.gmra.mxu0 %v1638
          %v1702 = vpop.f32.mrf.mxu0
          %v1703 = vadd.f32 %v1296, %v1702
          %1704 = vmatmul.f32.gmra.mxu0 %v1641
          %v1705 = vpop.f32.mrf.mxu0
          %v1706 = vadd.f32 %v1299, %v1705
          %1707 = vmatmul.f32.gmra.mxu0 %v1644
          %v1708 = vpop.f32.mrf.mxu0
          %v1709 = vadd.f32 %v1302, %v1708
          %1710 = vmatmul.f32.gmra.mxu0 %v1647
          %v1711 = vpop.f32.mrf.mxu0
          %v1712 = vadd.f32 %v1305, %v1711
          %1713 = vdwg.mxu0
          %v1714 = vadd.f32 %v1667, %v1407
          %v1715 = vadd.f32 %v1670, %v1410
          %v1716 = vadd.f32 %v1673, %v1413
          %v1717 = vadd.f32 %v1676, %v1416
          %v1718 = vadd.f32 %v1679, %v1419
          %v1719 = vadd.f32 %v1682, %v1422
          %v1720 = vadd.f32 %v1685, %v1425
          %v1721 = vadd.f32 %v1688, %v1428
          %v1722 = vadd.f32 %v1691, %v1431
          %v1723 = vadd.f32 %v1694, %v1434
          %v1724 = vadd.f32 %v1697, %v1437
          %v1725 = vadd.f32 %v1700, %v1440
          %v1726 = vadd.f32 %v1703, %v1443
          %v1727 = vadd.f32 %v1706, %v1446
          %v1728 = vadd.f32 %v1709, %v1449
          %v1729 = vadd.f32 %v1712, %v1452
          %v1730 = vadd.f32 %v1714, %v1554
          %v1731 = vadd.f32 %v1715, %v1557
          %v1732 = vadd.f32 %v1716, %v1560
          %v1733 = vadd.f32 %v1717, %v1563
          %v1734 = vadd.f32 %v1718, %v1566
          %v1735 = vadd.f32 %v1719, %v1569
          %v1736 = vadd.f32 %v1720, %v1572
          %v1737 = vadd.f32 %v1721, %v1575
          %v1738 = vadd.f32 %v1722, %v1578
          %v1739 = vadd.f32 %v1723, %v1581
          %v1740 = vadd.f32 %v1724, %v1584
          %v1741 = vadd.f32 %v1725, %v1587
          %v1742 = vadd.f32 %v1726, %v1590
          %v1743 = vadd.f32 %v1727, %v1593
          %v1744 = vadd.f32 %v1728, %v1596
          %v1745 = vadd.f32 %v1729, %v1599
          %v1746 = vld [vmem:[%s11] sm:$0x1]
          %v1748 = vperm.slane %v1746, 0
          %v1750 = vadd.f32 %v1730, %v1748
          %v1751 = vadd.f32 %v1731, %v1748
          %v1752 = vadd.f32 %v1732, %v1748
          %v1753 = vadd.f32 %v1733, %v1748
          %v1754 = vadd.f32 %v1734, %v1748
          %v1755 = vadd.f32 %v1735, %v1748
          %v1756 = vadd.f32 %v1736, %v1748
          %v1757 = vadd.f32 %v1737, %v1748
          %v1758 = vadd.f32 %v1738, %v1748
          %v1759 = vadd.f32 %v1739, %v1748
          %v1760 = vadd.f32 %v1740, %v1748
          %v1761 = vadd.f32 %v1741, %v1748
          %v1762 = vadd.f32 %v1742, %v1748
          %v1763 = vadd.f32 %v1743, %v1748
          %v1764 = vadd.f32 %v1744, %v1748
          %v1765 = vadd.f32 %v1745, %v1748
          %1766 = vst [vmem:[%s616] sm:$0xff] %v1750
          %1767 = vst [vmem:[%s616 + $0x8] sm:$0xff] %v1751
          %1768 = vst [vmem:[%s616 + $0x10] sm:$0xff] %v1752
          %1769 = vst [vmem:[%s616 + $0x18] sm:$0xff] %v1753
          %1770 = vst [vmem:[%s616 + $0x20] sm:$0xff] %v1754
          %1771 = vst [vmem:[%s616 + $0x28] sm:$0xff] %v1755
          %1772 = vst [vmem:[%s616 + $0x30] sm:$0xff] %v1756
          %1773 = vst [vmem:[%s616 + $0x38] sm:$0xff] %v1757
          %1774 = vst [vmem:[%s616 + $0x40] sm:$0xff] %v1758
          %1775 = vst [vmem:[%s616 + $0x48] sm:$0xff] %v1759
          %1776 = vst [vmem:[%s616 + $0x50] sm:$0xff] %v1760
          %1777 = vst [vmem:[%s616 + $0x58] sm:$0xff] %v1761
          %1778 = vst [vmem:[%s616 + $0x60] sm:$0xff] %v1762
          %1779 = vst [vmem:[%s616 + $0x68] sm:$0xff] %v1763
          %1780 = vst [vmem:[%s616 + $0x70] sm:$0xff] %v1764
          %1781 = vst [vmem:[%s616 + $0x78] sm:$0xff] %v1765
        $region92: #{tpu_custom_call.1} parent=67 // pred_fallthru
          _
        %s1782 = sand.u32 %s346, 1
        %s1783 = scalar_lea.sflag [#allocation7], %s1782
        %s1784 = sand.u32 %s346, 1
        %s1785 = smul.addr %s1784, 128
        %s1786 = scalar_lea.vmem [#allocation13], %s1785
        // Predicated region
        $region93: #{tpu_custom_call.1} parent=67 // pred_check
          %p1787 = pneg %p356
        $region94: #{tpu_custom_call.1} parent=67 // pred_check_branch
          %1789 = sbr.rel (%p1787) target = $region96
        $region95: #{tpu_custom_call.1} parent=67 // pred_region
          %s1790 = smul.u32 16, %s37
          %1792 = vsyncadd %s1783, 0
          %s1793 = smul.addr %s1790, 8
          %s1794 = scalar_lea.hbm %s12, %s1793
          %s1795 = sshll.u32 %s1786, 4
          %s1796 = int_to_ptr.vmem [resolvable:$true] %s1795
          %s1797 = sshll.u32 %s1794, 4
          %s1798 = int_to_ptr.hbm [resolvable:$true] %s1797
          %1803 = dma.vmem_to_hbm [thread:$0]  %s1796, 2048, %s1798, %s1783, 128, 128, 8
        $region96: #{tpu_custom_call.1} parent=67 // pred_fallthru
          _
      $region68: #{tpu_custom_call.1} parent=5 // pred_fallthru
        _
      %p1804 = scmp.le.s32.totalorder 2, %s28
      // Predicated region
      $region97: #{tpu_custom_call.1} parent=5 // pred_check
        %p1805 = pneg %p1804
      $region98: #{tpu_custom_call.1} parent=5 // pred_check_branch
        %1807 = sbr.rel (%p1805) target = $region100
      $region99: #{tpu_custom_call.1} parent=5 // pred_region
        %s1808 = ssub.s32 %s28, 2
        // Predicated region
        $region101: #{tpu_custom_call.1} parent=99 // pred_check
          %p1809 = pneg %p362
        $region102: #{tpu_custom_call.1} parent=99 // pred_check_branch
          %1811 = sbr.rel (%p1809) target = $region104
        $region103: #{tpu_custom_call.1} parent=99 // pred_region
          %s1812 = sand.u32 %s347, 1
          %s1813 = scalar_lea.sflag [#allocation7], %s1812
          %s1814 = sand.u32 %s347, 1
          %s1815 = smul.addr %s1814, 128
          %s1816 = scalar_lea.vmem [#allocation13], %s1815
          %1818 = dma.done %s1813, 2048
        $region104: #{tpu_custom_call.1} parent=99 // pred_fallthru
          _
      $region100: #{tpu_custom_call.1} parent=5 // pred_fallthru
        _
    $region6: #{tpu_custom_call.1} parent=1 // loop_footer
      %s32 = sadd.s32 1, %s28
    $region7: #{tpu_custom_call.1} parent=1 // loop_footer_branch
      %27 = sbr.rel target = $region3
    $region8: #{tpu_custom_call.1} parent=1 // loop_exit
      _
    %1819 = vsyncpa [#allocation6], 1
    %s1820 = scalar_lea.sflag [#allocation6], 1
    %1821 = vsyncpa %s1820, 1
    %1822 = vsyncpa [#allocation11], 1
    %s1823 = scalar_lea.sflag [#allocation11], 1
    %1824 = vsyncpa %s1823, 1
    %1825 = vsyncpa [#allocation7], 1
    %s1826 = scalar_lea.sflag [#allocation7], 1
    %1827 = vsyncpa %s1826, 1
    %1828 = vsyncpa [#allocation8], 1
    %s1829 = scalar_lea.sflag [#allocation8], 1
    %1830 = vsyncpa %s1829, 1

</llo_original>
